<compile_context>
chip_gen: v7x
topology: tpu7x:2x2x1
jax: 0.10.0
libtpu: 0.0.40
codegen_flags: <defaults>
</compile_context>

<pallas_src>
import jax
import jax.numpy as jnp
from jax.experimental import pallas as pl
from jax.experimental.pallas import tpu as pltpu


# ----------------------------- configuration -------------------------------
def _round_up(n, m):
    return -(-n // m) * m


IN_DIM = 32                 # in_dim (feature width produced by base_model)
HIDDEN = 384                # neuron_each_layer / neuron_each_local_l1 (hard-coded 384)
N_LOCAL_L2 = (8, 8)         # neuron_each_local_l2
L = len(N_LOCAL_L2)
TOTAL_CLASS = sum(N_LOCAL_L2)
BETA = 0.5
BATCH = 8
D_CAT = HIDDEN + IN_DIM     # width of cat([output, x], dim=1) in the reference
W_DTYPE = jnp.bfloat16      # storage/stream dtype for all weight matrices

OUT_PAD = _round_up(TOTAL_CLASS, 128)           # lane-dense output width (128)
XW_WIDTH = HIDDEN * L + OUT_PAD                 # fused x-dot width (896)
HW_WIDTH = HIDDEN + max(HIDDEN, OUT_PAD)        # fused per-level h-dot width (768)

MAX_TB = 256   # batch-tile cap: fills the 256-row MXU on v6e/v7x (use 128 on v5e)


# ------------------------------- kernel ------------------------------------
def hmcn_kernel(x_ref, wxf_ref, bxf_ref, whf_ref, bl1_ref, wl2bd_ref, bl2f_ref,
                out_ref):
    f32, bf16 = jnp.float32, jnp.bfloat16

    # One fused, lane-dense x-dot covering the level-0 linear, the x-halves of
    # every level>=1 linear and the final linear, plus all of their biases.
    xw = (jnp.dot(x_ref[...].astype(bf16), wxf_ref[...],
                  preferred_element_type=f32)
          + bxf_ref[...])                                  # (TB, XW_WIDTH) f32

    # Level 0 hidden state.
    h = jnp.maximum(xw[:, 0:HIDDEN], 0.0)                  # (TB, HIDDEN) f32

    lo_pre = []
    g_logits = None
    # Static unrolled loop over the hierarchical levels (sequential chain).
    for l in range(L):
        # Fused dot on h: [local_l1_W[l] | W_h[l+1]]  (last level: | final_W_h).
        t = jnp.dot(h.astype(bf16), whf_ref[l], preferred_element_type=f32)
        lo_pre.append(jnp.maximum(t[:, 0:HIDDEN] + bl1_ref[l], 0.0))
        if l < L - 1:
            h = jnp.maximum(t[:, HIDDEN:2 * HIDDEN]
                            + xw[:, HIDDEN * (l + 1):HIDDEN * (l + 2)], 0.0)
        else:
            g_logits = (t[:, HIDDEN:HIDDEN + OUT_PAD]
                        + xw[:, HIDDEN * L:HIDDEN * L + OUT_PAD])

    # All local-l2 heads as one block-diagonal, lane-dense dot.
    local_logits = (jnp.dot(jnp.concatenate(lo_pre, axis=1).astype(bf16),
                            wl2bd_ref[...], preferred_element_type=f32)
                    + bl2f_ref[...])                       # (TB, OUT_PAD) f32

    out_ref[...] = (BETA * jax.nn.sigmoid(g_logits)
                    + (1.0 - BETA) * jax.nn.sigmoid(local_logits))


# ------------------------------- wrapper ------------------------------------
def _choose_tb(batch):
    bp = _round_up(batch, 8)
    if bp <= 128:
        return bp                       # small batch: single tile
    # >=2 tiles so both v7x TensorCores get work; cap tile rows at MAX_TB.
    return min(MAX_TB, _round_up(-(-bp // 2), 128))


@jax.jit
def hmcn_forward(x, wxf, bxf, whf, bl1, wl2bd, bl2f):
    B = x.shape[0]
    TB = _choose_tb(B)
    n_tiles = -(-B // TB)
    Bp = n_tiles * TB
    # Pad only when needed; feed batch % TB == 0 upstream to skip this copy.
    xp = jnp.pad(x, ((0, Bp - B), (0, 0))) if Bp != B else x

    # Weight/bias BlockSpecs use constant index maps, so their tiles stay
    # resident across grid steps.  (pl.Buffered(1) would drop their unneeded
    # second pipeline buffer, but at ~1.3 MB of bf16 weights that is irrelevant
    # on all generations, so the default is kept.)
    out = pl.pallas_call(
        hmcn_kernel,
        out_shape=jax.ShapeDtypeStruct((Bp, OUT_PAD), jnp.float32),
        grid_spec=pltpu.PrefetchScalarGridSpec(
            num_scalar_prefetch=0,
            grid=(n_tiles,),
            in_specs=[
                pl.BlockSpec((TB, IN_DIM), lambda i: (i, 0)),             # x tile
                pl.BlockSpec((IN_DIM, XW_WIDTH), lambda i: (0, 0)),       # fused x-weight
                pl.BlockSpec((1, XW_WIDTH), lambda i: (0, 0)),            # fused x-bias
                pl.BlockSpec((L, HIDDEN, HW_WIDTH), lambda i: (0, 0, 0)), # fused h-weights
                pl.BlockSpec((L, 1, HIDDEN), lambda i: (0, 0, 0)),        # local-l1 biases
                pl.BlockSpec((L * HIDDEN, OUT_PAD), lambda i: (0, 0)),    # block-diag l2 W
                pl.BlockSpec((1, OUT_PAD), lambda i: (0, 0)),             # fused l2 bias
            ],
            out_specs=pl.BlockSpec((TB, OUT_PAD), lambda i: (i, 0)),
        ),
        compiler_params=pltpu.CompilerParams(
            dimension_semantics=("parallel",)),
    )(xp, wxf, bxf, whf, bl1, wl2bd, bl2f)
    return out[:B, :TOTAL_CLASS]


# --------------------------- parameter setup --------------------------------
def _unif(key, shape, fan_in):
    bound = float(fan_in) ** -0.5
    return jax.random.uniform(key, shape, jnp.float32, minval=-bound, maxval=bound)


def init_params(key):
    """f32 parameters in the original (PyTorch-like) layout."""
    p = {}
    p["w0"] = _unif(jax.random.fold_in(key, 0), (IN_DIM, HIDDEN), IN_DIM)
    p["b0"] = _unif(jax.random.fold_in(key, 1), (1, HIDDEN), IN_DIM)
    # levels 1..L-1 take cat([h, x]) of width D_CAT
    p["w_rest"] = jnp.stack(
        [_unif(jax.random.fold_in(key, 10 + l), (D_CAT, HIDDEN), D_CAT)
         for l in range(1, L)])                               # (L-1, D_CAT, HIDDEN)
    p["b_rest"] = jnp.stack(
        [_unif(jax.random.fold_in(key, 20 + l), (1, HIDDEN), D_CAT)
         for l in range(1, L)])                               # (L-1, 1, HIDDEN)
    p["wl1"] = jnp.stack(
        [_unif(jax.random.fold_in(key, 100 + l), (HIDDEN, HIDDEN), HIDDEN)
         for l in range(L)])                                  # (L, HIDDEN, HIDDEN)
    p["bl1"] = jnp.stack(
        [_unif(jax.random.fold_in(key, 200 + l), (1, HIDDEN), HIDDEN)
         for l in range(L)])                                  # (L, 1, HIDDEN)
    # NOTE: stacking assumes uniform local-l2 widths (true for (8, 8)); the
    # block-diagonal packing in prepare_kernel_params generalizes regardless.
    p["wl2"] = jnp.stack(
        [_unif(jax.random.fold_in(key, 300 + l), (HIDDEN, N_LOCAL_L2[l]), HIDDEN)
         for l in range(L)])                                  # (L, HIDDEN, n_l)
    p["bl2"] = jnp.stack(
        [_unif(jax.random.fold_in(key, 400 + l), (1, N_LOCAL_L2[l]), HIDDEN)
         for l in range(L)])                                  # (L, 1, n_l)
    p["wf"] = _unif(jax.random.fold_in(key, 500), (D_CAT, TOTAL_CLASS), D_CAT)
    p["bf"] = _unif(jax.random.fold_in(key, 501), (1, TOTAL_CLASS), D_CAT)
    return p


def prepare_kernel_params(p):
    """Host-side fusion/padding of the PyTorch-layout weights for the kernel."""
    f32 = jnp.float32
    pad_out = OUT_PAD - TOTAL_CLASS

    wh = [p["w_rest"][i, :HIDDEN, :] for i in range(L - 1)]      # (HIDDEN, HIDDEN)
    wx = [p["w_rest"][i, HIDDEN:, :] for i in range(L - 1)]      # (IN_DIM, HIDDEN)
    wfh_pad = jnp.pad(p["wf"][:HIDDEN, :], ((0, 0), (0, pad_out)))   # (HIDDEN, OUT_PAD)
    wfx_pad = jnp.pad(p["wf"][HIDDEN:, :], ((0, 0), (0, pad_out)))   # (IN_DIM, OUT_PAD)
    bf_pad = jnp.pad(p["bf"], ((0, 0), (0, pad_out)))                # (1, OUT_PAD)

    # Fused x-side weight/bias: [w0 | wx_1 .. wx_{L-1} | wfx_pad].
    wxf = jnp.concatenate([p["w0"], *wx, wfx_pad], axis=1)           # (IN_DIM, XW_WIDTH)
    bxf = jnp.concatenate(
        [p["b0"], *[p["b_rest"][i] for i in range(L - 1)], bf_pad], axis=1)

    # Per-level fused h-side weight: [wl1[l] | wh[l]] (l < L-1) or
    # [wl1[L-1] | wfh_pad] (last level), zero-padded to a uniform HW_WIDTH.
    whf = []
    for l in range(L):
        tail = wh[l] if l < L - 1 else wfh_pad
        m = jnp.concatenate([p["wl1"][l], tail], axis=1)
        m = jnp.pad(m, ((0, 0), (0, HW_WIDTH - m.shape[1])))
        whf.append(m)
    whf = jnp.stack(whf)                                             # (L, HIDDEN, HW_WIDTH)

    # Block-diagonal local-l2 weight (handles heterogeneous widths) + fused
    # bias, zero-padded to 128 output lanes.
    wl2bd = jnp.zeros((L * HIDDEN, OUT_PAD), f32)
    col = 0
    for l in range(L):
        n_l = N_LOCAL_L2[l]
        wl2bd = wl2bd.at[l * HIDDEN:(l + 1) * HIDDEN, col:col + n_l].set(p["wl2"][l])
        col += n_l
    bl2f = jnp.pad(jnp.concatenate([p["bl2"][l] for l in range(L)], axis=1),
                   ((0, 0), (0, pad_out)))                           # (1, OUT_PAD)

    return (wxf.astype(W_DTYPE), bxf.astype(f32), whf.astype(W_DTYPE),
            p["bl1"].astype(f32), wl2bd.astype(W_DTYPE), bl2f.astype(f32))


# ------------------------- pure-JAX reference --------------------------------
def hmcn_reference(x, p, mimic_bf16=False):
    """PyTorch-layout reference.  With mimic_bf16=True, weights AND dot-input
    activations are rounded to bf16 (accumulation stays f32), mirroring the
    kernel's numerics."""
    f32 = jnp.float32
    cast = ((lambda a: a.astype(jnp.bfloat16).astype(f32)) if mimic_bf16
            else (lambda a: a))
    xq = cast(x)

    h = jax.nn.relu(xq @ cast(p["w0"]) + p["b0"])
    locals_ = []
    for l in range(L):
        if l > 0:
            h = jax.nn.relu(jnp.concatenate([cast(h), xq], axis=1)
                            @ cast(p["w_rest"][l - 1]) + p["b_rest"][l - 1])
        lo = jax.nn.relu(cast(h) @ cast(p["wl1"][l]) + p["bl1"][l])
        locals_.append(cast(lo) @ cast(p["wl2"][l]) + p["bl2"][l])
    g = jax.nn.sigmoid(jnp.concatenate([cast(h), xq], axis=1) @ cast(p["wf"])
                       + p["bf"])
    loc = jax.nn.sigmoid(jnp.concatenate(locals_, axis=1))
    return BETA * g + (1.0 - BETA) * loc


# --------------------------------- main --------------------------------------
if __name__ == "__main__":
    key = jax.random.PRNGKey(0)
    params = init_params(key)
    kparams = prepare_kernel_params(params)

    # Small single-tile case plus a multi-tile (padded, partial final tile) case.
    for batch in (BATCH, 200):
        x = jax.random.normal(jax.random.fold_in(key, 999 + batch),
                              (batch, IN_DIM), jnp.float32)

        out = jax.block_until_ready(hmcn_forward(x, *kparams))
        assert out.shape == (batch, TOTAL_CLASS), out.shape

        # Apples-to-apples: reference mirroring the kernel's bf16 dot numerics.
        ref_q = hmcn_reference(x, params, mimic_bf16=True)
        err_q = float(jnp.max(jnp.abs(out - ref_q)))
        assert err_q < 1e-2, f"batch={batch}: max abs err vs bf16-mimic ref: {err_q}"

        # Sanity vs the full-f32 reference (bf16 weight/activation rounding is
        # benign for these sigmoid-bounded outputs).
        ref_f32 = hmcn_reference(x, params, mimic_bf16=False)
        err_f32 = float(jnp.max(jnp.abs(out - ref_f32)))
        assert err_f32 < 5e-2, f"batch={batch}: max abs err vs f32 ref: {err_f32}"

    print("KERNEL_OK")
</pallas_src>

<mosaic_0001>
module attributes {stable_mosaic.version = 11 : i64} {
  func.func @hmcn_kernel(%arg0: i32, %arg1: memref<8x32xf32, #tpu.memory_space<vmem>>, %arg2: memref<32x896xbf16, #tpu.memory_space<vmem>>, %arg3: memref<1x896xf32, #tpu.memory_space<vmem>>, %arg4: memref<2x384x768xbf16, #tpu.memory_space<vmem>>, %arg5: memref<2x1x384xf32, #tpu.memory_space<vmem>>, %arg6: memref<768x128xbf16, #tpu.memory_space<vmem>>, %arg7: memref<1x128xf32, #tpu.memory_space<vmem>>, %arg8: memref<8x128xf32, #tpu.memory_space<vmem>>) attributes {dimension_semantics = [#tpu.dimension_semantics<parallel>], iteration_bounds = array<i64: 1>, scalar_prefetch = 0 : i64, scratch_operands = 0 : i64, tpu.core_type = #tpu.core_type<tc>, window_params = [{transform_indices = @transform_0, window_bounds = array<i64: 8, 32>}, {pipeline_mode = #tpu.pipeline_mode<synchronous>, transform_indices = @transform_1, window_bounds = array<i64: 32, 896>}, {pipeline_mode = #tpu.pipeline_mode<synchronous>, transform_indices = @transform_2, window_bounds = array<i64: 1, 896>}, {pipeline_mode = #tpu.pipeline_mode<synchronous>, transform_indices = @transform_3, window_bounds = array<i64: 2, 384, 768>}, {pipeline_mode = #tpu.pipeline_mode<synchronous>, transform_indices = @transform_4, window_bounds = array<i64: 2, 1, 384>}, {pipeline_mode = #tpu.pipeline_mode<synchronous>, transform_indices = @transform_5, window_bounds = array<i64: 768, 128>}, {pipeline_mode = #tpu.pipeline_mode<synchronous>, transform_indices = @transform_6, window_bounds = array<i64: 1, 128>}, {transform_indices = @transform_7, window_bounds = array<i64: 8, 128>}]} {
    %c0 = arith.constant 0 : index
    %c0_0 = arith.constant 0 : index
    %0 = vector.load %arg1[%c0, %c0_0] : memref<8x32xf32, #tpu.memory_space<vmem>>, vector<8x32xf32>
    %1 = arith.truncf %0 : vector<8x32xf32> to vector<8x32xbf16>
    %c0_1 = arith.constant 0 : index
    %c0_2 = arith.constant 0 : index
    %2 = vector.load %arg2[%c0_1, %c0_2] : memref<32x896xbf16, #tpu.memory_space<vmem>>, vector<32x896xbf16>
    %cst = arith.constant dense<0.000000e+00> : vector<8x896xf32>
    %3 = tpu.matmul %1, %2, %cst {dimension_numbers = #tpu.dot_dimension_numbers<[1], [0], [0], [1], [0, 0, 1, 1], [], []>} : vector<8x32xbf16>, vector<32x896xbf16>, vector<8x896xf32> -> vector<8x896xf32>
    %c0_3 = arith.constant 0 : index
    %c0_4 = arith.constant 0 : index
    %4 = vector.load %arg3[%c0_3, %c0_4] : memref<1x896xf32, #tpu.memory_space<vmem>>, vector<1x896xf32>
    %5 = vector.broadcast %4 : vector<1x896xf32> to vector<8x896xf32>
    %6 = arith.addf %3, %5 : vector<8x896xf32>
    %7 = vector.extract_strided_slice %6 {offsets = [0, 0], sizes = [8, 384], strides = [1, 1]} : vector<8x896xf32> to vector<8x384xf32>
    %cst_5 = arith.constant 0.000000e+00 : f32
    %8 = vector.broadcast %cst_5 : f32 to vector<8x384xf32>
    %9 = arith.maximumf %7, %8 : vector<8x384xf32>
    %10 = arith.truncf %9 : vector<8x384xf32> to vector<8x384xbf16>
    %c0_6 = arith.constant 0 : index
    %c0_7 = arith.constant 0 : index
    %c0_8 = arith.constant 0 : index
    %11 = vector.load %arg4[%c0_6, %c0_7, %c0_8] : memref<2x384x768xbf16, #tpu.memory_space<vmem>>, vector<1x384x768xbf16>
    %12 = vector.shape_cast %11 : vector<1x384x768xbf16> to vector<384x768xbf16>
    %cst_9 = arith.constant dense<0.000000e+00> : vector<8x768xf32>
    %13 = tpu.matmul %10, %12, %cst_9 {dimension_numbers = #tpu.dot_dimension_numbers<[1], [0], [0], [1], [0, 0, 1, 1], [], []>} : vector<8x384xbf16>, vector<384x768xbf16>, vector<8x768xf32> -> vector<8x768xf32>
    %14 = vector.extract_strided_slice %13 {offsets = [0, 0], sizes = [8, 384], strides = [1, 1]} : vector<8x768xf32> to vector<8x384xf32>
    %c0_10 = arith.constant 0 : index
    %c0_11 = arith.constant 0 : index
    %c0_12 = arith.constant 0 : index
    %15 = vector.load %arg5[%c0_10, %c0_11, %c0_12] : memref<2x1x384xf32, #tpu.memory_space<vmem>>, vector<1x1x384xf32>
    %16 = vector.shape_cast %15 : vector<1x1x384xf32> to vector<1x384xf32>
    %17 = vector.broadcast %16 : vector<1x384xf32> to vector<8x384xf32>
    %18 = arith.addf %14, %17 : vector<8x384xf32>
    %cst_13 = arith.constant 0.000000e+00 : f32
    %19 = vector.broadcast %cst_13 : f32 to vector<8x384xf32>
    %20 = arith.maximumf %18, %19 : vector<8x384xf32>
    %21 = vector.extract_strided_slice %13 {offsets = [0, 384], sizes = [8, 384], strides = [1, 1]} : vector<8x768xf32> to vector<8x384xf32>
    %22 = vector.extract_strided_slice %6 {offsets = [0, 384], sizes = [8, 384], strides = [1, 1]} : vector<8x896xf32> to vector<8x384xf32>
    %23 = arith.addf %21, %22 : vector<8x384xf32>
    %cst_14 = arith.constant 0.000000e+00 : f32
    %24 = vector.broadcast %cst_14 : f32 to vector<8x384xf32>
    %25 = arith.maximumf %23, %24 : vector<8x384xf32>
    %26 = arith.truncf %25 : vector<8x384xf32> to vector<8x384xbf16>
    %c1 = arith.constant 1 : index
    %c0_15 = arith.constant 0 : index
    %c0_16 = arith.constant 0 : index
    %27 = vector.load %arg4[%c1, %c0_15, %c0_16] : memref<2x384x768xbf16, #tpu.memory_space<vmem>>, vector<1x384x768xbf16>
    %28 = vector.shape_cast %27 : vector<1x384x768xbf16> to vector<384x768xbf16>
    %cst_17 = arith.constant dense<0.000000e+00> : vector<8x768xf32>
    %29 = tpu.matmul %26, %28, %cst_17 {dimension_numbers = #tpu.dot_dimension_numbers<[1], [0], [0], [1], [0, 0, 1, 1], [], []>} : vector<8x384xbf16>, vector<384x768xbf16>, vector<8x768xf32> -> vector<8x768xf32>
    %30 = vector.extract_strided_slice %29 {offsets = [0, 0], sizes = [8, 384], strides = [1, 1]} : vector<8x768xf32> to vector<8x384xf32>
    %c1_18 = arith.constant 1 : index
    %c0_19 = arith.constant 0 : index
    %c0_20 = arith.constant 0 : index
    %31 = vector.load %arg5[%c1_18, %c0_19, %c0_20] : memref<2x1x384xf32, #tpu.memory_space<vmem>>, vector<1x1x384xf32>
    %32 = vector.shape_cast %31 : vector<1x1x384xf32> to vector<1x384xf32>
    %33 = vector.broadcast %32 : vector<1x384xf32> to vector<8x384xf32>
    %34 = arith.addf %30, %33 : vector<8x384xf32>
    %cst_21 = arith.constant 0.000000e+00 : f32
    %35 = vector.broadcast %cst_21 : f32 to vector<8x384xf32>
    %36 = arith.maximumf %34, %35 : vector<8x384xf32>
    %37 = vector.extract_strided_slice %29 {offsets = [0, 384], sizes = [8, 128], strides = [1, 1]} : vector<8x768xf32> to vector<8x128xf32>
    %38 = vector.extract_strided_slice %6 {offsets = [0, 768], sizes = [8, 128], strides = [1, 1]} : vector<8x896xf32> to vector<8x128xf32>
    %39 = arith.addf %37, %38 : vector<8x128xf32>
    %40 = tpu.concatenate %20, %36 in 1 : vector<8x384xf32>, vector<8x384xf32> -> vector<8x768xf32>
    %41 = arith.truncf %40 : vector<8x768xf32> to vector<8x768xbf16>
    %c0_22 = arith.constant 0 : index
    %c0_23 = arith.constant 0 : index
    %42 = vector.load %arg6[%c0_22, %c0_23] : memref<768x128xbf16, #tpu.memory_space<vmem>>, vector<768x128xbf16>
    %cst_24 = arith.constant dense<0.000000e+00> : vector<8x128xf32>
    %43 = tpu.matmul %41, %42, %cst_24 {dimension_numbers = #tpu.dot_dimension_numbers<[1], [0], [0], [1], [0, 0, 1, 1], [], []>} : vector<8x768xbf16>, vector<768x128xbf16>, vector<8x128xf32> -> vector<8x128xf32>
    %c0_25 = arith.constant 0 : index
    %c0_26 = arith.constant 0 : index
    %44 = vector.load %arg7[%c0_25, %c0_26] : memref<1x128xf32, #tpu.memory_space<vmem>>, vector<1x128xf32>
    %45 = vector.broadcast %44 : vector<1x128xf32> to vector<8x128xf32>
    %46 = arith.addf %43, %45 : vector<8x128xf32>
    %47 = arith.negf %39 : vector<8x128xf32>
    %48 = math.exp %47 : vector<8x128xf32>
    %cst_27 = arith.constant 1.000000e+00 : f32
    %49 = vector.broadcast %cst_27 : f32 to vector<8x128xf32>
    %50 = arith.addf %49, %48 : vector<8x128xf32>
    %51 = arith.divf %49, %50 : vector<8x128xf32>
    %cst_28 = arith.constant 5.000000e-01 : f32
    %52 = vector.broadcast %cst_28 : f32 to vector<8x128xf32>
    %53 = arith.mulf %52, %51 : vector<8x128xf32>
    %54 = arith.negf %46 : vector<8x128xf32>
    %55 = math.exp %54 : vector<8x128xf32>
    %cst_29 = arith.constant 1.000000e+00 : f32
    %56 = vector.broadcast %cst_29 : f32 to vector<8x128xf32>
    %57 = arith.addf %56, %55 : vector<8x128xf32>
    %58 = arith.divf %56, %57 : vector<8x128xf32>
    %cst_30 = arith.constant 5.000000e-01 : f32
    %59 = vector.broadcast %cst_30 : f32 to vector<8x128xf32>
    %60 = arith.mulf %59, %58 : vector<8x128xf32>
    %61 = arith.addf %53, %60 : vector<8x128xf32>
    %c0_31 = arith.constant 0 : index
    %c0_32 = arith.constant 0 : index
    %62 = vector.load %arg8[%c0_31, %c0_32] : memref<8x128xf32, #tpu.memory_space<vmem>>, vector<8x128xf32>
    tpu.vector_store %arg8[%c0_31, %c0_32], %61 {strides = array<i32>} : memref<8x128xf32, #tpu.memory_space<vmem>>, vector<8x128xf32>,
    return
  }
  func.func @transform_0(%arg0: i32) -> (i32, i32) {
    %c0_i32 = arith.constant 0 : i32
    %c0_i32_0 = arith.constant 0 : i32
    return %arg0, %c0_i32 : i32, i32
  }
  func.func @transform_1(%arg0: i32) -> (i32, i32) {
    %c0_i32 = arith.constant 0 : i32
    %c0_i32_0 = arith.constant 0 : i32
    %c0_i32_1 = arith.constant 0 : i32
    return %c0_i32, %c0_i32_0 : i32, i32
  }
  func.func @transform_2(%arg0: i32) -> (i32, i32) {
    %c0_i32 = arith.constant 0 : i32
    %c0_i32_0 = arith.constant 0 : i32
    %c0_i32_1 = arith.constant 0 : i32
    return %c0_i32, %c0_i32_0 : i32, i32
  }
  func.func @transform_3(%arg0: i32) -> (i32, i32, i32) {
    %c0_i32 = arith.constant 0 : i32
    %c0_i32_0 = arith.constant 0 : i32
    %c0_i32_1 = arith.constant 0 : i32
    %c0_i32_2 = arith.constant 0 : i32
    return %c0_i32, %c0_i32_0, %c0_i32_1 : i32, i32, i32
  }
  func.func @transform_4(%arg0: i32) -> (i32, i32, i32) {
    %c0_i32 = arith.constant 0 : i32
    %c0_i32_0 = arith.constant 0 : i32
    %c0_i32_1 = arith.constant 0 : i32
    %c0_i32_2 = arith.constant 0 : i32
    return %c0_i32, %c0_i32_0, %c0_i32_1 : i32, i32, i32
  }
  func.func @transform_5(%arg0: i32) -> (i32, i32) {
    %c0_i32 = arith.constant 0 : i32
    %c0_i32_0 = arith.constant 0 : i32
    %c0_i32_1 = arith.constant 0 : i32
    return %c0_i32, %c0_i32_0 : i32, i32
  }
  func.func @transform_6(%arg0: i32) -> (i32, i32) {
    %c0_i32 = arith.constant 0 : i32
    %c0_i32_0 = arith.constant 0 : i32
    %c0_i32_1 = arith.constant 0 : i32
    return %c0_i32, %c0_i32_0 : i32, i32
  }
  func.func @transform_7(%arg0: i32) -> (i32, i32) {
    %c0_i32 = arith.constant 0 : i32
    %c0_i32_0 = arith.constant 0 : i32
    return %arg0, %c0_i32 : i32, i32
  }
}

</mosaic_0001>

<llo_original>
// kernel: hmcn_forward.1
$region0: #{hmcn_forward.1}
  #allocation0 [shape = 'u32[]', space=smem, size = 0x4, offset = 0x4, fixed_abs, tag = 'smem constant byte address 0x4 - core index']
  #allocation1 [shape = 'u32[144,128]{1,0:T(1,128)}', space=vmem, size = 0x12000, scoped, tag = 'internal scratch']
  %s0 = inlined_call_operand.hbm [shape: f32[8,32], index: 0, kind: input, shape index: {}]
  %s1 = inlined_call_operand.hbm [shape: bf16[32,896], index: 1, kind: input, shape index: {}]
  %s2 = inlined_call_operand.hbm [shape: f32[1,896], index: 2, kind: input, shape index: {}]
  %s3 = inlined_call_operand.hbm [shape: bf16[2,384,768], index: 3, kind: input, shape index: {}]
  %s4 = inlined_call_operand.hbm [shape: f32[2,1,384], index: 4, kind: input, shape index: {}]
  %s5 = inlined_call_operand.hbm [shape: bf16[768,128], index: 5, kind: input, shape index: {}]
  %s6 = inlined_call_operand.hbm [shape: f32[1,128], index: 6, kind: input, shape index: {}]
  %s7 = inlined_call_operand.hbm [shape: f32[8,128], index: 7, kind: output, shape index: {}]
  %s8 = sld [smem:[#allocation0]]
  $region66: #{hmcn_forward.1} parent=0
    _
  %s10 = ssub.s32 1, %s8
  %s11 = scalar_select 0, %s10, %s8
  $region1: #{hmcn_forward.1} parent=0
    #allocation2 [shape = 'u8[4096]{0}', space=vmem, size = 0x1000, scoped, tag = 'input window, operand 0, single buffered']
    #allocation3 [shape = 's32[1]{0}', space=sflag, size = 0x4, scoped, tag = 'scoped memory for hmcn_forward.1']
    #allocation4 [shape = 's32[1]{0}', space=sflag, size = 0x4, scoped, tag = 'scoped memory for hmcn_forward.1']
    #allocation5 [shape = 'u8[57344]{0}', space=vmem, size = 0xe000, scoped, tag = 'input window, operand 1, single buffered']
    #allocation6 [shape = 's32[1]{0}', space=sflag, size = 0x4, scoped, tag = 'scoped memory for hmcn_forward.1']
    #allocation7 [shape = 'u8[3584]{0}', space=vmem, size = 0x1000, scoped, tag = 'input window, operand 2, single buffered']
    #allocation8 [shape = 'u8[1179648]{0}', space=vmem, size = 0x120000, scoped, tag = 'input window, operand 3, single buffered']
    #allocation9 [shape = 's32[1]{0}', space=sflag, size = 0x4, scoped, tag = 'scoped memory for hmcn_forward.1']
    #allocation10 [shape = 'u8[3072]{0}', space=vmem, size = 0xc00, scoped, tag = 'input window, operand 4, single buffered']
    #allocation11 [shape = 'u8[196608]{0}', space=vmem, size = 0x30000, scoped, tag = 'input window, operand 5, single buffered']
    #allocation12 [shape = 's32[1]{0}', space=sflag, size = 0x4, scoped, tag = 'scoped memory for hmcn_forward.1']
    #allocation13 [shape = 'u8[512]{0}', space=vmem, size = 0x400, scoped, tag = 'input window, operand 6, single buffered']
    #allocation14 [shape = 'u8[4096]{0}', space=vmem, size = 0x1000, scoped, tag = 'output window, operand 0, single buffered']
    %12 = vsyncpa [#allocation3], 0
    %13 = vsyncpa [#allocation6], 0
    %14 = vsyncpa [#allocation9], 0
    %15 = vsyncpa [#allocation12], 0
    %16 = vsyncpa [#allocation4], 0
    // Predicated region
    $region2: #{hmcn_forward.1} parent=1 // pred_check
      _
    $region3: #{hmcn_forward.1} parent=1 // pred_check_branch
      %18 = sbr.rel (0) target = $region5
    $region4: #{hmcn_forward.1} parent=1 // pred_region
      %s20 = ssub.s32 128, 128
      %21 = vsyncadd [#allocation3], %s20
      %s23 = sshll.u32 [#allocation2], 4
      %s24 = int_to_ptr.vmem [resolvable:$true] %s23
      %26 = dma.hbm_to_vmem [thread:$0]  %s0, 128, %s24, [#allocation3]
    $region5: #{hmcn_forward.1} parent=1 // pred_fallthru
      _
    // Predicated region
    $region6: #{hmcn_forward.1} parent=1 // pred_check
      _
    $region7: #{hmcn_forward.1} parent=1 // pred_check_branch
      %28 = sbr.rel (0) target = $region9
    $region8: #{hmcn_forward.1} parent=1 // pred_region
      %s30 = ssub.s32 1792, 1792
      %31 = vsyncadd [#allocation6], %s30
      %s32 = sshll.u32 [#allocation5], 4
      %s33 = int_to_ptr.vmem [resolvable:$true] %s32
      %38 = dma.hbm_to_vmem [thread:$0]  %s1, 1792, %s33, [#allocation6], 448, 448, 28
    $region9: #{hmcn_forward.1} parent=1 // pred_fallthru
      _
    // Predicated region
    $region10: #{hmcn_forward.1} parent=1 // pred_check
      _
    $region11: #{hmcn_forward.1} parent=1 // pred_check_branch
      %40 = sbr.rel (0) target = $region13
    $region12: #{hmcn_forward.1} parent=1 // pred_region
      %s42 = ssub.s32 112, 112
      %43 = vsyncadd [#allocation6], %s42
      %s45 = sshll.u32 [#allocation7], 4
      %s46 = int_to_ptr.vmem [resolvable:$true] %s45
      %48 = dma.hbm_to_vmem [thread:$0]  %s2, 112, %s46, [#allocation6]
    $region13: #{hmcn_forward.1} parent=1 // pred_fallthru
      _
    // Predicated region
    $region14: #{hmcn_forward.1} parent=1 // pred_check
      _
    $region15: #{hmcn_forward.1} parent=1 // pred_check_branch
      %50 = sbr.rel (0) target = $region17
    $region16: #{hmcn_forward.1} parent=1 // pred_region
      %s52 = ssub.s32 36864, 36864
      %53 = vsyncadd [#allocation9], %s52
      %s54 = sshll.u32 [#allocation8], 4
      %s55 = int_to_ptr.vmem [resolvable:$true] %s54
      %60 = dma.hbm_to_vmem [thread:$0]  %s3, 36864, %s55, [#allocation9], 384, 384, 24
    $region17: #{hmcn_forward.1} parent=1 // pred_fallthru
      _
    // Predicated region
    $region18: #{hmcn_forward.1} parent=1 // pred_check
      _
    $region19: #{hmcn_forward.1} parent=1 // pred_check_branch
      %62 = sbr.rel (0) target = $region21
    $region20: #{hmcn_forward.1} parent=1 // pred_region
      %s64 = ssub.s32 96, 96
      %65 = vsyncadd [#allocation9], %s64
      %s66 = sshll.u32 [#allocation10], 4
      %s67 = int_to_ptr.vmem [resolvable:$true] %s66
      %72 = dma.hbm_to_vmem [thread:$0]  %s4, 96, %s67, [#allocation9], 48, 48, 3
    $region21: #{hmcn_forward.1} parent=1 // pred_fallthru
      _
    // Predicated region
    $region22: #{hmcn_forward.1} parent=1 // pred_check
      _
    $region23: #{hmcn_forward.1} parent=1 // pred_check_branch
      %74 = sbr.rel (0) target = $region25
    $region24: #{hmcn_forward.1} parent=1 // pred_region
      %s76 = ssub.s32 6144, 6144
      %77 = vsyncadd [#allocation12], %s76
      %s78 = sshll.u32 [#allocation11], 4
      %s79 = int_to_ptr.vmem [resolvable:$true] %s78
      %84 = dma.hbm_to_vmem [thread:$0]  %s5, 6144, %s79, [#allocation12], 64, 64, 4
    $region25: #{hmcn_forward.1} parent=1 // pred_fallthru
      _
    // Predicated region
    $region26: #{hmcn_forward.1} parent=1 // pred_check
      _
    $region27: #{hmcn_forward.1} parent=1 // pred_check_branch
      %86 = sbr.rel (0) target = $region29
    $region28: #{hmcn_forward.1} parent=1 // pred_region
      %s88 = ssub.s32 16, 16
      %89 = vsyncadd [#allocation12], %s88
      %s91 = sshll.u32 [#allocation13], 4
      %s92 = int_to_ptr.vmem [resolvable:$true] %s91
      %94 = dma.hbm_to_vmem [thread:$0]  %s6, 16, %s92, [#allocation12]
    $region29: #{hmcn_forward.1} parent=1 // pred_fallthru
      _
    // Predicated region
    $region30: #{hmcn_forward.1} parent=1 // pred_check
      _
    $region31: #{hmcn_forward.1} parent=1 // pred_check_branch
      %96 = sbr.rel (0) target = $region33
    $region32: #{hmcn_forward.1} parent=1 // pred_region
      %97 = dma.done [#allocation3], 128
    $region33: #{hmcn_forward.1} parent=1 // pred_fallthru
      _
    // Predicated region
    $region34: #{hmcn_forward.1} parent=1 // pred_check
      _
    $region35: #{hmcn_forward.1} parent=1 // pred_check_branch
      %99 = sbr.rel (0) target = $region37
    $region36: #{hmcn_forward.1} parent=1 // pred_region
      %100 = dma.done [#allocation6], 1792
    $region37: #{hmcn_forward.1} parent=1 // pred_fallthru
      _
    // Predicated region
    $region38: #{hmcn_forward.1} parent=1 // pred_check
      _
    $region39: #{hmcn_forward.1} parent=1 // pred_check_branch
      %102 = sbr.rel (0) target = $region41
    $region40: #{hmcn_forward.1} parent=1 // pred_region
      %103 = dma.done [#allocation6], 112
    $region41: #{hmcn_forward.1} parent=1 // pred_fallthru
      _
    // Predicated region
    $region42: #{hmcn_forward.1} parent=1 // pred_check
      _
    $region43: #{hmcn_forward.1} parent=1 // pred_check_branch
      %105 = sbr.rel (0) target = $region45
    $region44: #{hmcn_forward.1} parent=1 // pred_region
      %106 = dma.done [#allocation9], 36864
    $region45: #{hmcn_forward.1} parent=1 // pred_fallthru
      _
    // Predicated region
    $region46: #{hmcn_forward.1} parent=1 // pred_check
      _
    $region47: #{hmcn_forward.1} parent=1 // pred_check_branch
      %108 = sbr.rel (0) target = $region49
    $region48: #{hmcn_forward.1} parent=1 // pred_region
      %109 = dma.done [#allocation9], 96
    $region49: #{hmcn_forward.1} parent=1 // pred_fallthru
      _
    // Predicated region
    $region50: #{hmcn_forward.1} parent=1 // pred_check
      _
    $region51: #{hmcn_forward.1} parent=1 // pred_check_branch
      %111 = sbr.rel (0) target = $region53
    $region52: #{hmcn_forward.1} parent=1 // pred_region
      %112 = dma.done [#allocation12], 6144
    $region53: #{hmcn_forward.1} parent=1 // pred_fallthru
      _
    // Predicated region
    $region54: #{hmcn_forward.1} parent=1 // pred_check
      _
    $region55: #{hmcn_forward.1} parent=1 // pred_check_branch
      %114 = sbr.rel (0) target = $region57
    $region56: #{hmcn_forward.1} parent=1 // pred_region
      %115 = dma.done [#allocation12], 16
    $region57: #{hmcn_forward.1} parent=1 // pred_fallthru
      _
    %v117 = vld [vmem:[#allocation2] sm:$0xff]
    %v118 = vpack.c.bf16 %v117, %v117
    %v119 = vld [vmem:[#allocation5] sm:$0xff]
    %v120 = vld [vmem:[#allocation5 + $0x8] sm:$0xff]
    %v121 = vld [vmem:[#allocation5 + $0x10] sm:$0xff]
    %v122 = vld [vmem:[#allocation5 + $0x18] sm:$0xf]
    %v123 = vld [vmem:[#allocation5 + $0x1c] sm:$0xff]
    %v124 = vld [vmem:[#allocation5 + $0x24] sm:$0xff]
    %v125 = vld [vmem:[#allocation5 + $0x2c] sm:$0xff]
    %v126 = vld [vmem:[#allocation5 + $0x34] sm:$0xf]
    %v127 = vld [vmem:[#allocation5 + $0x38] sm:$0xff]
    %v128 = vld [vmem:[#allocation5 + $0x40] sm:$0xff]
    %v129 = vld [vmem:[#allocation5 + $0x48] sm:$0xff]
    %v130 = vld [vmem:[#allocation5 + $0x50] sm:$0xf]
    %v131 = vld [vmem:[#allocation5 + $0x54] sm:$0xff]
    %v132 = vld [vmem:[#allocation5 + $0x5c] sm:$0xff]
    %v133 = vld [vmem:[#allocation5 + $0x64] sm:$0xff]
    %v134 = vld [vmem:[#allocation5 + $0x6c] sm:$0xf]
    %v135 = vld [vmem:[#allocation7] sm:$0xff]
    %v137 = vlaneseq
    %v138 = vshrl.u32 %v137, 7
    %v139 = vsub.s32 0, %v138
    %v140 = vrot.slane %v135, %v139
    %v141 = vlaneseq
    %v142 = vshrl.u32 %v141, 7
    %v143 = vsub.s32 1, %v142
    %v144 = vrot.slane %v135, %v143
    %v145 = vlaneseq
    %v146 = vshrl.u32 %v145, 7
    %v147 = vsub.s32 2, %v146
    %v148 = vrot.slane %v135, %v147
    %v149 = vlaneseq
    %v150 = vshrl.u32 %v149, 7
    %v151 = vsub.s32 3, %v150
    %v152 = vrot.slane %v135, %v151
    %v153 = vlaneseq
    %v154 = vshrl.u32 %v153, 7
    %v155 = vsub.s32 4, %v154
    %v156 = vrot.slane %v135, %v155
    %v157 = vlaneseq
    %v158 = vshrl.u32 %v157, 7
    %v159 = vsub.s32 5, %v158
    %v160 = vrot.slane %v135, %v159
    %v161 = vlaneseq
    %v162 = vshrl.u32 %v161, 7
    %v163 = vsub.s32 6, %v162
    %v164 = vrot.slane %v135, %v163
    %v188 = vunpack.c.l.b16 %v119
    %v189 = vunpack.c.h.b16 %v119
    %v190 = vunpack.c.l.b16 %v120
    %v191 = vunpack.c.h.b16 %v120
    %v192 = vunpack.c.l.b16 %v121
    %v193 = vunpack.c.h.b16 %v121
    %v194 = vunpack.c.l.b16 %v122
    %v195 = vunpack.c.l.b16 %v123
    %v196 = vunpack.c.h.b16 %v123
    %v197 = vunpack.c.l.b16 %v124
    %v198 = vunpack.c.h.b16 %v124
    %v199 = vunpack.c.l.b16 %v125
    %v200 = vunpack.c.h.b16 %v125
    %v201 = vunpack.c.l.b16 %v126
    %v202 = vunpack.c.l.b16 %v127
    %v203 = vunpack.c.h.b16 %v127
    %v204 = vunpack.c.l.b16 %v128
    %v205 = vunpack.c.h.b16 %v128
    %v206 = vunpack.c.l.b16 %v129
    %v207 = vunpack.c.h.b16 %v129
    %v208 = vunpack.c.l.b16 %v130
    %v209 = vunpack.c.l.b16 %v131
    %v210 = vunpack.c.h.b16 %v131
    %v211 = vunpack.c.l.b16 %v132
    %v212 = vunpack.c.h.b16 %v132
    %v213 = vunpack.c.l.b16 %v133
    %v214 = vunpack.c.h.b16 %v133
    %v215 = vunpack.c.l.b16 %v134
    %v216 = vpack.c.b16 %v195, %v188
    %v217 = vpack.c.b16 %v196, %v189
    %v218 = vpack.c.b16 %v197, %v190
    %v219 = vpack.c.b16 %v198, %v191
    %v220 = vpack.c.b16 %v199, %v192
    %v221 = vpack.c.b16 %v200, %v193
    %v222 = vpack.c.b16 %v201, %v194
    %v223 = vpack.c.b16 %v209, %v202
    %v224 = vpack.c.b16 %v210, %v203
    %v225 = vpack.c.b16 %v211, %v204
    %v226 = vpack.c.b16 %v212, %v205
    %v227 = vpack.c.b16 %v213, %v206
    %v228 = vpack.c.b16 %v214, %v207
    %v229 = vpack.c.b16 %v215, %v208
    %vm244 = vcmask 261120
    %v246 = vsel %vm244, %v118, 0
    %248 = vmatprep.subr.bf16.mxu0 %v217
    %249 = vmatpush1.bf16.msra.mxu0 %v216
    %250 = vmatprep.subr.bf16.mxu0 %v224
    %251 = vmatpush1.bf16.msra.mxu0 %v223
    %252 = vmatprep.subr.bf16.mxu0 0
    %253 = vmatpush1.bf16.msra.mxu0 0
    %254 = vmatprep.subr.bf16.mxu0 0
    %255 = vmatpush1.bf16.msra.mxu0 0
    %256 = vmatprep.subr.bf16.mxu0 0
    %257 = vmatpush1.bf16.msra.mxu0 0
    %258 = vmatprep.subr.bf16.mxu0 0
    %259 = vmatpush1.bf16.msra.mxu0 0
    %260 = vmatprep.subr.bf16.mxu0 0
    %261 = vmatpush1.bf16.msra.mxu0 0
    %262 = vmatprep.subr.bf16.mxu0 0
    %263 = vmatpush1.bf16.msra.mxu0 0
    %264 = vmatprep.subr.bf16.mxu0 0
    %265 = vmatpush1.bf16.msra.mxu0 0
    %266 = vmatprep.subr.bf16.mxu0 0
    %267 = vmatpush1.bf16.msra.mxu0 0
    %268 = vmatprep.subr.bf16.mxu0 0
    %269 = vmatpush1.bf16.msra.mxu0 0
    %270 = vmatprep.subr.bf16.mxu0 0
    %271 = vmatpush1.bf16.msra.mxu0 0
    %272 = vmatprep.subr.bf16.mxu0 0
    %273 = vmatpush1.bf16.msra.mxu0 0
    %274 = vmatprep.subr.bf16.mxu0 0
    %275 = vmatpush1.bf16.msra.mxu0 0
    %276 = vmatprep.subr.bf16.mxu0 0
    %277 = vmatpush1.bf16.msra.mxu0 0
    %278 = vmatprep.subr.bf16.mxu0 0
    %279 = vmatpush1.bf16.msra.mxu0 0
    %280 = vmatprep.mubr.bf16.mxu0 0
    %281 = vmatmul.mubr.bf16.gmra.mrb[0].mxu0 %v246
    %v282 = vpop.f32.mrb[0].mxu0
    %v283 = vadd.f32 %v140, %v282
    %v284 = vpop.f32.mrb[0].mxu0
    %v285 = vadd.f32 %v144, %v284
    %v286 = vpop.f32.mrb[0].mxu0
    %v287 = vpop.f32.mrb[0].mxu0
    %288 = vdwg.mxu0
    %289 = vmatprep.subr.bf16.mxu0 %v219
    %290 = vmatpush1.bf16.msra.mxu0 %v218
    %291 = vmatprep.subr.bf16.mxu0 %v226
    %292 = vmatpush1.bf16.msra.mxu0 %v225
    %293 = vmatprep.subr.bf16.mxu0 0
    %294 = vmatpush1.bf16.msra.mxu0 0
    %295 = vmatprep.subr.bf16.mxu0 0
    %296 = vmatpush1.bf16.msra.mxu0 0
    %297 = vmatprep.subr.bf16.mxu0 0
    %298 = vmatpush1.bf16.msra.mxu0 0
    %299 = vmatprep.subr.bf16.mxu0 0
    %300 = vmatpush1.bf16.msra.mxu0 0
    %301 = vmatprep.subr.bf16.mxu0 0
    %302 = vmatpush1.bf16.msra.mxu0 0
    %303 = vmatprep.subr.bf16.mxu0 0
    %304 = vmatpush1.bf16.msra.mxu0 0
    %305 = vmatprep.subr.bf16.mxu0 0
    %306 = vmatpush1.bf16.msra.mxu0 0
    %307 = vmatprep.subr.bf16.mxu0 0
    %308 = vmatpush1.bf16.msra.mxu0 0
    %309 = vmatprep.subr.bf16.mxu0 0
    %310 = vmatpush1.bf16.msra.mxu0 0
    %311 = vmatprep.subr.bf16.mxu0 0
    %312 = vmatpush1.bf16.msra.mxu0 0
    %313 = vmatprep.subr.bf16.mxu0 0
    %314 = vmatpush1.bf16.msra.mxu0 0
    %315 = vmatprep.subr.bf16.mxu0 0
    %316 = vmatpush1.bf16.msra.mxu0 0
    %317 = vmatprep.subr.bf16.mxu0 0
    %318 = vmatpush1.bf16.msra.mxu0 0
    %319 = vmatprep.subr.bf16.mxu0 0
    %320 = vmatpush1.bf16.msra.mxu0 0
    %321 = vmatprep.mubr.bf16.mxu0 0
    %322 = vmatmul.mubr.bf16.gmra.mrb[0].mxu0 %v246
    %v323 = vpop.f32.mrb[0].mxu0
    %v324 = vadd.f32 %v148, %v323
    %v325 = vpop.f32.mrb[0].mxu0
    %v326 = vadd.f32 %v152, %v325
    %v327 = vpop.f32.mrb[0].mxu0
    %v328 = vpop.f32.mrb[0].mxu0
    %329 = vdwg.mxu0
    %330 = vmatprep.subr.bf16.mxu0 %v221
    %331 = vmatpush1.bf16.msra.mxu0 %v220
    %332 = vmatprep.subr.bf16.mxu0 %v228
    %333 = vmatpush1.bf16.msra.mxu0 %v227
    %334 = vmatprep.subr.bf16.mxu0 0
    %335 = vmatpush1.bf16.msra.mxu0 0
    %336 = vmatprep.subr.bf16.mxu0 0
    %337 = vmatpush1.bf16.msra.mxu0 0
    %338 = vmatprep.subr.bf16.mxu0 0
    %339 = vmatpush1.bf16.msra.mxu0 0
    %340 = vmatprep.subr.bf16.mxu0 0
    %341 = vmatpush1.bf16.msra.mxu0 0
    %342 = vmatprep.subr.bf16.mxu0 0
    %343 = vmatpush1.bf16.msra.mxu0 0
    %344 = vmatprep.subr.bf16.mxu0 0
    %345 = vmatpush1.bf16.msra.mxu0 0
    %346 = vmatprep.subr.bf16.mxu0 0
    %347 = vmatpush1.bf16.msra.mxu0 0
    %348 = vmatprep.subr.bf16.mxu0 0
    %349 = vmatpush1.bf16.msra.mxu0 0
    %350 = vmatprep.subr.bf16.mxu0 0
    %351 = vmatpush1.bf16.msra.mxu0 0
    %352 = vmatprep.subr.bf16.mxu0 0
    %353 = vmatpush1.bf16.msra.mxu0 0
    %354 = vmatprep.subr.bf16.mxu0 0
    %355 = vmatpush1.bf16.msra.mxu0 0
    %356 = vmatprep.subr.bf16.mxu0 0
    %357 = vmatpush1.bf16.msra.mxu0 0
    %358 = vmatprep.subr.bf16.mxu0 0
    %359 = vmatpush1.bf16.msra.mxu0 0
    %360 = vmatprep.subr.bf16.mxu0 0
    %361 = vmatpush1.bf16.msra.mxu0 0
    %362 = vmatprep.mubr.bf16.mxu0 0
    %363 = vmatmul.mubr.bf16.gmra.mrb[0].mxu0 %v246
    %v364 = vpop.f32.mrb[0].mxu0
    %v365 = vadd.f32 %v156, %v364
    %v366 = vpop.f32.mrb[0].mxu0
    %v367 = vadd.f32 %v160, %v366
    %v368 = vpop.f32.mrb[0].mxu0
    %v369 = vpop.f32.mrb[0].mxu0
    %370 = vdwg.mxu0
    %371 = vmatprep.subr.bf16.mxu0 0
    %372 = vmatpush1.bf16.msra.mxu0 %v222
    %373 = vmatprep.subr.bf16.mxu0 0
    %374 = vmatpush1.bf16.msra.mxu0 %v229
    %375 = vmatprep.subr.bf16.mxu0 0
    %376 = vmatpush1.bf16.msra.mxu0 0
    %377 = vmatprep.subr.bf16.mxu0 0
    %378 = vmatpush1.bf16.msra.mxu0 0
    %379 = vmatprep.subr.bf16.mxu0 0
    %380 = vmatpush1.bf16.msra.mxu0 0
    %381 = vmatprep.subr.bf16.mxu0 0
    %382 = vmatpush1.bf16.msra.mxu0 0
    %383 = vmatprep.subr.bf16.mxu0 0
    %384 = vmatpush1.bf16.msra.mxu0 0
    %385 = vmatprep.subr.bf16.mxu0 0
    %386 = vmatpush1.bf16.msra.mxu0 0
    %387 = vmatprep.subr.bf16.mxu0 0
    %388 = vmatpush1.bf16.msra.mxu0 0
    %389 = vmatprep.subr.bf16.mxu0 0
    %390 = vmatpush1.bf16.msra.mxu0 0
    %391 = vmatprep.subr.bf16.mxu0 0
    %392 = vmatpush1.bf16.msra.mxu0 0
    %393 = vmatprep.subr.bf16.mxu0 0
    %394 = vmatpush1.bf16.msra.mxu0 0
    %395 = vmatprep.subr.bf16.mxu0 0
    %396 = vmatpush1.bf16.msra.mxu0 0
    %397 = vmatprep.subr.bf16.mxu0 0
    %398 = vmatpush1.bf16.msra.mxu0 0
    %399 = vmatprep.subr.bf16.mxu0 0
    %400 = vmatpush1.bf16.msra.mxu0 0
    %401 = vmatprep.subr.bf16.mxu0 0
    %402 = vmatpush1.bf16.msra.mxu0 0
    %403 = vmatprep.mubr.bf16.mxu0 0
    %404 = vmatmul.mubr.bf16.gmra.mrb[0].mxu0 %v246
    %v405 = vpop.f32.mrb[0].mxu0
    %v406 = vadd.f32 %v164, %v405
    %v407 = vpop.f32.mrb[0].mxu0
    %v408 = vpop.f32.mrb[0].mxu0
    %v409 = vpop.f32.mrb[0].mxu0
    %410 = vdwg.mxu0
    %v411 = vmax.f32 %v283, 0.0
    %v412 = vmax.f32 %v285, 0.0
    %v413 = vmax.f32 %v324, 0.0
    %v414 = vpack.c.bf16 %v411, %v411
    %v415 = vpack.c.bf16 %v412, %v412
    %v416 = vpack.c.bf16 %v413, %v413
    %v417 = vld [vmem:[#allocation8] sm:$0xff]
    %v418 = vld [vmem:[#allocation8 + $0x8] sm:$0xff]
    %v419 = vld [vmem:[#allocation8 + $0x10] sm:$0xff]
    %v420 = vld [vmem:[#allocation8 + $0x18] sm:$0xff]
    %v421 = vld [vmem:[#allocation8 + $0x20] sm:$0xff]
    %v422 = vld [vmem:[#allocation8 + $0x28] sm:$0xff]
    %v423 = vld [vmem:[#allocation8 + $0x30] sm:$0xff]
    %v424 = vld [vmem:[#allocation8 + $0x38] sm:$0xff]
    %v425 = vld [vmem:[#allocation8 + $0x40] sm:$0xff]
    %v426 = vld [vmem:[#allocation8 + $0x48] sm:$0xff]
    %v427 = vld [vmem:[#allocation8 + $0x50] sm:$0xff]
    %v428 = vld [vmem:[#allocation8 + $0x58] sm:$0xff]
    %v429 = vld [vmem:[#allocation8 + $0x60] sm:$0xff]
    %v430 = vld [vmem:[#allocation8 + $0x68] sm:$0xff]
    %v431 = vld [vmem:[#allocation8 + $0x70] sm:$0xff]
    %v432 = vld [vmem:[#allocation8 + $0x78] sm:$0xff]
    %v433 = vld [vmem:[#allocation8 + $0x80] sm:$0xff]
    %v434 = vld [vmem:[#allocation8 + $0x88] sm:$0xff]
    %v435 = vld [vmem:[#allocation8 + $0x90] sm:$0xff]
    %v436 = vld [vmem:[#allocation8 + $0x98] sm:$0xff]
    %v437 = vld [vmem:[#allocation8 + $0xa0] sm:$0xff]
    %v438 = vld [vmem:[#allocation8 + $0xa8] sm:$0xff]
    %v439 = vld [vmem:[#allocation8 + $0xb0] sm:$0xff]
    %v440 = vld [vmem:[#allocation8 + $0xb8] sm:$0xff]
    %v441 = vld [vmem:[#allocation8 + $0xc0] sm:$0xff]
    %v442 = vld [vmem:[#allocation8 + $0xc8] sm:$0xff]
    %v443 = vld [vmem:[#allocation8 + $0xd0] sm:$0xff]
    %v444 = vld [vmem:[#allocation8 + $0xd8] sm:$0xff]
    %v445 = vld [vmem:[#allocation8 + $0xe0] sm:$0xff]
    %v446 = vld [vmem:[#allocation8 + $0xe8] sm:$0xff]
    %v447 = vld [vmem:[#allocation8 + $0xf0] sm:$0xff]
    %v448 = vld [vmem:[#allocation8 + $0xf8] sm:$0xff]
    %v449 = vld [vmem:[#allocation8 + $0x100] sm:$0xff]
    %v450 = vld [vmem:[#allocation8 + $0x108] sm:$0xff]
    %v451 = vld [vmem:[#allocation8 + $0x110] sm:$0xff]
    %v452 = vld [vmem:[#allocation8 + $0x118] sm:$0xff]
    %v453 = vld [vmem:[#allocation8 + $0x120] sm:$0xff]
    %v454 = vld [vmem:[#allocation8 + $0x128] sm:$0xff]
    %v455 = vld [vmem:[#allocation8 + $0x130] sm:$0xff]
    %v456 = vld [vmem:[#allocation8 + $0x138] sm:$0xff]
    %v457 = vld [vmem:[#allocation8 + $0x140] sm:$0xff]
    %v458 = vld [vmem:[#allocation8 + $0x148] sm:$0xff]
    %v459 = vld [vmem:[#allocation8 + $0x150] sm:$0xff]
    %v460 = vld [vmem:[#allocation8 + $0x158] sm:$0xff]
    %v461 = vld [vmem:[#allocation8 + $0x160] sm:$0xff]
    %v462 = vld [vmem:[#allocation8 + $0x168] sm:$0xff]
    %v463 = vld [vmem:[#allocation8 + $0x170] sm:$0xff]
    %v464 = vld [vmem:[#allocation8 + $0x178] sm:$0xff]
    %v465 = vld [vmem:[#allocation8 + $0x180] sm:$0xff]
    %v466 = vld [vmem:[#allocation8 + $0x188] sm:$0xff]
    %v467 = vld [vmem:[#allocation8 + $0x190] sm:$0xff]
    %v468 = vld [vmem:[#allocation8 + $0x198] sm:$0xff]
    %v469 = vld [vmem:[#allocation8 + $0x1a0] sm:$0xff]
    %v470 = vld [vmem:[#allocation8 + $0x1a8] sm:$0xff]
    %v471 = vld [vmem:[#allocation8 + $0x1b0] sm:$0xff]
    %v472 = vld [vmem:[#allocation8 + $0x1b8] sm:$0xff]
    %v473 = vld [vmem:[#allocation8 + $0x1c0] sm:$0xff]
    %v474 = vld [vmem:[#allocation8 + $0x1c8] sm:$0xff]
    %v475 = vld [vmem:[#allocation8 + $0x1d0] sm:$0xff]
    %v476 = vld [vmem:[#allocation8 + $0x1d8] sm:$0xff]
    %v477 = vld [vmem:[#allocation8 + $0x1e0] sm:$0xff]
    %v478 = vld [vmem:[#allocation8 + $0x1e8] sm:$0xff]
    %v479 = vld [vmem:[#allocation8 + $0x1f0] sm:$0xff]
    %v480 = vld [vmem:[#allocation8 + $0x1f8] sm:$0xff]
    %v481 = vld [vmem:[#allocation8 + $0x200] sm:$0xff]
    %v482 = vld [vmem:[#allocation8 + $0x208] sm:$0xff]
    %v483 = vld [vmem:[#allocation8 + $0x210] sm:$0xff]
    %v484 = vld [vmem:[#allocation8 + $0x218] sm:$0xff]
    %v485 = vld [vmem:[#allocation8 + $0x220] sm:$0xff]
    %v486 = vld [vmem:[#allocation8 + $0x228] sm:$0xff]
    %v487 = vld [vmem:[#allocation8 + $0x230] sm:$0xff]
    %v488 = vld [vmem:[#allocation8 + $0x238] sm:$0xff]
    %v489 = vld [vmem:[#allocation8 + $0x240] sm:$0xff]
    %v490 = vld [vmem:[#allocation8 + $0x248] sm:$0xff]
    %v491 = vld [vmem:[#allocation8 + $0x250] sm:$0xff]
    %v492 = vld [vmem:[#allocation8 + $0x258] sm:$0xff]
    %v493 = vld [vmem:[#allocation8 + $0x260] sm:$0xff]
    %v494 = vld [vmem:[#allocation8 + $0x268] sm:$0xff]
    %v495 = vld [vmem:[#allocation8 + $0x270] sm:$0xff]
    %v496 = vld [vmem:[#allocation8 + $0x278] sm:$0xff]
    %v497 = vld [vmem:[#allocation8 + $0x280] sm:$0xff]
    %v498 = vld [vmem:[#allocation8 + $0x288] sm:$0xff]
    %v499 = vld [vmem:[#allocation8 + $0x290] sm:$0xff]
    %v500 = vld [vmem:[#allocation8 + $0x298] sm:$0xff]
    %v501 = vld [vmem:[#allocation8 + $0x2a0] sm:$0xff]
    %v502 = vld [vmem:[#allocation8 + $0x2a8] sm:$0xff]
    %v503 = vld [vmem:[#allocation8 + $0x2b0] sm:$0xff]
    %v504 = vld [vmem:[#allocation8 + $0x2b8] sm:$0xff]
    %v505 = vld [vmem:[#allocation8 + $0x2c0] sm:$0xff]
    %v506 = vld [vmem:[#allocation8 + $0x2c8] sm:$0xff]
    %v507 = vld [vmem:[#allocation8 + $0x2d0] sm:$0xff]
    %v508 = vld [vmem:[#allocation8 + $0x2d8] sm:$0xff]
    %v509 = vld [vmem:[#allocation8 + $0x2e0] sm:$0xff]
    %v510 = vld [vmem:[#allocation8 + $0x2e8] sm:$0xff]
    %v511 = vld [vmem:[#allocation8 + $0x2f0] sm:$0xff]
    %v512 = vld [vmem:[#allocation8 + $0x2f8] sm:$0xff]
    %v513 = vld [vmem:[#allocation8 + $0x300] sm:$0xff]
    %v514 = vld [vmem:[#allocation8 + $0x308] sm:$0xff]
    %v515 = vld [vmem:[#allocation8 + $0x310] sm:$0xff]
    %v516 = vld [vmem:[#allocation8 + $0x318] sm:$0xff]
    %v517 = vld [vmem:[#allocation8 + $0x320] sm:$0xff]
    %v518 = vld [vmem:[#allocation8 + $0x328] sm:$0xff]
    %v519 = vld [vmem:[#allocation8 + $0x330] sm:$0xff]
    %v520 = vld [vmem:[#allocation8 + $0x338] sm:$0xff]
    %v521 = vld [vmem:[#allocation8 + $0x340] sm:$0xff]
    %v522 = vld [vmem:[#allocation8 + $0x348] sm:$0xff]
    %v523 = vld [vmem:[#allocation8 + $0x350] sm:$0xff]
    %v524 = vld [vmem:[#allocation8 + $0x358] sm:$0xff]
    %v525 = vld [vmem:[#allocation8 + $0x360] sm:$0xff]
    %v526 = vld [vmem:[#allocation8 + $0x368] sm:$0xff]
    %v527 = vld [vmem:[#allocation8 + $0x370] sm:$0xff]
    %v528 = vld [vmem:[#allocation8 + $0x378] sm:$0xff]
    %v529 = vld [vmem:[#allocation8 + $0x380] sm:$0xff]
    %v530 = vld [vmem:[#allocation8 + $0x388] sm:$0xff]
    %v531 = vld [vmem:[#allocation8 + $0x390] sm:$0xff]
    %v532 = vld [vmem:[#allocation8 + $0x398] sm:$0xff]
    %v533 = vld [vmem:[#allocation8 + $0x3a0] sm:$0xff]
    %v534 = vld [vmem:[#allocation8 + $0x3a8] sm:$0xff]
    %v535 = vld [vmem:[#allocation8 + $0x3b0] sm:$0xff]
    %v536 = vld [vmem:[#allocation8 + $0x3b8] sm:$0xff]
    %v537 = vld [vmem:[#allocation8 + $0x3c0] sm:$0xff]
    %v538 = vld [vmem:[#allocation8 + $0x3c8] sm:$0xff]
    %v539 = vld [vmem:[#allocation8 + $0x3d0] sm:$0xff]
    %v540 = vld [vmem:[#allocation8 + $0x3d8] sm:$0xff]
    %v541 = vld [vmem:[#allocation8 + $0x3e0] sm:$0xff]
    %v542 = vld [vmem:[#allocation8 + $0x3e8] sm:$0xff]
    %v543 = vld [vmem:[#allocation8 + $0x3f0] sm:$0xff]
    %v544 = vld [vmem:[#allocation8 + $0x3f8] sm:$0xff]
    %v545 = vld [vmem:[#allocation8 + $0x400] sm:$0xff]
    %v546 = vld [vmem:[#allocation8 + $0x408] sm:$0xff]
    %v547 = vld [vmem:[#allocation8 + $0x410] sm:$0xff]
    %v548 = vld [vmem:[#allocation8 + $0x418] sm:$0xff]
    %v549 = vld [vmem:[#allocation8 + $0x420] sm:$0xff]
    %v550 = vld [vmem:[#allocation8 + $0x428] sm:$0xff]
    %v551 = vld [vmem:[#allocation8 + $0x430] sm:$0xff]
    %v552 = vld [vmem:[#allocation8 + $0x438] sm:$0xff]
    %v553 = vld [vmem:[#allocation8 + $0x440] sm:$0xff]
    %v554 = vld [vmem:[#allocation8 + $0x448] sm:$0xff]
    %v555 = vld [vmem:[#allocation8 + $0x450] sm:$0xff]
    %v556 = vld [vmem:[#allocation8 + $0x458] sm:$0xff]
    %v557 = vld [vmem:[#allocation8 + $0x460] sm:$0xff]
    %v558 = vld [vmem:[#allocation8 + $0x468] sm:$0xff]
    %v559 = vld [vmem:[#allocation8 + $0x470] sm:$0xff]
    %v560 = vld [vmem:[#allocation8 + $0x478] sm:$0xff]
    %v705 = vunpack.c.l.b16 %v417
    %v706 = vunpack.c.h.b16 %v417
    %v707 = vunpack.c.l.b16 %v418
    %v708 = vunpack.c.h.b16 %v418
    %v709 = vunpack.c.l.b16 %v419
    %v710 = vunpack.c.h.b16 %v419
    %v711 = vunpack.c.l.b16 %v420
    %v712 = vunpack.c.h.b16 %v420
    %v713 = vunpack.c.l.b16 %v421
    %v714 = vunpack.c.h.b16 %v421
    %v715 = vunpack.c.l.b16 %v422
    %v716 = vunpack.c.h.b16 %v422
    %v717 = vunpack.c.l.b16 %v423
    %v718 = vunpack.c.h.b16 %v423
    %v719 = vunpack.c.l.b16 %v424
    %v720 = vunpack.c.h.b16 %v424
    %v721 = vunpack.c.l.b16 %v425
    %v722 = vunpack.c.h.b16 %v425
    %v723 = vunpack.c.l.b16 %v426
    %v724 = vunpack.c.h.b16 %v426
    %v725 = vunpack.c.l.b16 %v427
    %v726 = vunpack.c.h.b16 %v427
    %v727 = vunpack.c.l.b16 %v428
    %v728 = vunpack.c.h.b16 %v428
    %v729 = vunpack.c.l.b16 %v429
    %v730 = vunpack.c.h.b16 %v429
    %v731 = vunpack.c.l.b16 %v430
    %v732 = vunpack.c.h.b16 %v430
    %v733 = vunpack.c.l.b16 %v431
    %v734 = vunpack.c.h.b16 %v431
    %v735 = vunpack.c.l.b16 %v432
    %v736 = vunpack.c.h.b16 %v432
    %v737 = vunpack.c.l.b16 %v433
    %v738 = vunpack.c.h.b16 %v433
    %v739 = vunpack.c.l.b16 %v434
    %v740 = vunpack.c.h.b16 %v434
    %v741 = vunpack.c.l.b16 %v435
    %v742 = vunpack.c.h.b16 %v435
    %v743 = vunpack.c.l.b16 %v436
    %v744 = vunpack.c.h.b16 %v436
    %v745 = vunpack.c.l.b16 %v437
    %v746 = vunpack.c.h.b16 %v437
    %v747 = vunpack.c.l.b16 %v438
    %v748 = vunpack.c.h.b16 %v438
    %v749 = vunpack.c.l.b16 %v439
    %v750 = vunpack.c.h.b16 %v439
    %v751 = vunpack.c.l.b16 %v440
    %v752 = vunpack.c.h.b16 %v440
    %v753 = vunpack.c.l.b16 %v441
    %v754 = vunpack.c.h.b16 %v441
    %v755 = vunpack.c.l.b16 %v442
    %v756 = vunpack.c.h.b16 %v442
    %v757 = vunpack.c.l.b16 %v443
    %v758 = vunpack.c.h.b16 %v443
    %v759 = vunpack.c.l.b16 %v444
    %v760 = vunpack.c.h.b16 %v444
    %v761 = vunpack.c.l.b16 %v445
    %v762 = vunpack.c.h.b16 %v445
    %v763 = vunpack.c.l.b16 %v446
    %v764 = vunpack.c.h.b16 %v446
    %v765 = vunpack.c.l.b16 %v447
    %v766 = vunpack.c.h.b16 %v447
    %v767 = vunpack.c.l.b16 %v448
    %v768 = vunpack.c.h.b16 %v448
    %v769 = vunpack.c.l.b16 %v449
    %v770 = vunpack.c.h.b16 %v449
    %v771 = vunpack.c.l.b16 %v450
    %v772 = vunpack.c.h.b16 %v450
    %v773 = vunpack.c.l.b16 %v451
    %v774 = vunpack.c.h.b16 %v451
    %v775 = vunpack.c.l.b16 %v452
    %v776 = vunpack.c.h.b16 %v452
    %v777 = vunpack.c.l.b16 %v453
    %v778 = vunpack.c.h.b16 %v453
    %v779 = vunpack.c.l.b16 %v454
    %v780 = vunpack.c.h.b16 %v454
    %v781 = vunpack.c.l.b16 %v455
    %v782 = vunpack.c.h.b16 %v455
    %v783 = vunpack.c.l.b16 %v456
    %v784 = vunpack.c.h.b16 %v456
    %v785 = vunpack.c.l.b16 %v457
    %v786 = vunpack.c.h.b16 %v457
    %v787 = vunpack.c.l.b16 %v458
    %v788 = vunpack.c.h.b16 %v458
    %v789 = vunpack.c.l.b16 %v459
    %v790 = vunpack.c.h.b16 %v459
    %v791 = vunpack.c.l.b16 %v460
    %v792 = vunpack.c.h.b16 %v460
    %v793 = vunpack.c.l.b16 %v461
    %v794 = vunpack.c.h.b16 %v461
    %v795 = vunpack.c.l.b16 %v462
    %v796 = vunpack.c.h.b16 %v462
    %v797 = vunpack.c.l.b16 %v463
    %v798 = vunpack.c.h.b16 %v463
    %v799 = vunpack.c.l.b16 %v464
    %v800 = vunpack.c.h.b16 %v464
    %v801 = vunpack.c.l.b16 %v465
    %v802 = vunpack.c.h.b16 %v465
    %v803 = vunpack.c.l.b16 %v466
    %v804 = vunpack.c.h.b16 %v466
    %v805 = vunpack.c.l.b16 %v467
    %v806 = vunpack.c.h.b16 %v467
    %v807 = vunpack.c.l.b16 %v468
    %v808 = vunpack.c.h.b16 %v468
    %v809 = vunpack.c.l.b16 %v469
    %v810 = vunpack.c.h.b16 %v469
    %v811 = vunpack.c.l.b16 %v470
    %v812 = vunpack.c.h.b16 %v470
    %v813 = vunpack.c.l.b16 %v471
    %v814 = vunpack.c.h.b16 %v471
    %v815 = vunpack.c.l.b16 %v472
    %v816 = vunpack.c.h.b16 %v472
    %v817 = vunpack.c.l.b16 %v473
    %v818 = vunpack.c.h.b16 %v473
    %v819 = vunpack.c.l.b16 %v474
    %v820 = vunpack.c.h.b16 %v474
    %v821 = vunpack.c.l.b16 %v475
    %v822 = vunpack.c.h.b16 %v475
    %v823 = vunpack.c.l.b16 %v476
    %v824 = vunpack.c.h.b16 %v476
    %v825 = vunpack.c.l.b16 %v477
    %v826 = vunpack.c.h.b16 %v477
    %v827 = vunpack.c.l.b16 %v478
    %v828 = vunpack.c.h.b16 %v478
    %v829 = vunpack.c.l.b16 %v479
    %v830 = vunpack.c.h.b16 %v479
    %v831 = vunpack.c.l.b16 %v480
    %v832 = vunpack.c.h.b16 %v480
    %v833 = vunpack.c.l.b16 %v481
    %v834 = vunpack.c.h.b16 %v481
    %v835 = vunpack.c.l.b16 %v482
    %v836 = vunpack.c.h.b16 %v482
    %v837 = vunpack.c.l.b16 %v483
    %v838 = vunpack.c.h.b16 %v483
    %v839 = vunpack.c.l.b16 %v484
    %v840 = vunpack.c.h.b16 %v484
    %v841 = vunpack.c.l.b16 %v485
    %v842 = vunpack.c.h.b16 %v485
    %v843 = vunpack.c.l.b16 %v486
    %v844 = vunpack.c.h.b16 %v486
    %v845 = vunpack.c.l.b16 %v487
    %v846 = vunpack.c.h.b16 %v487
    %v847 = vunpack.c.l.b16 %v488
    %v848 = vunpack.c.h.b16 %v488
    %v849 = vunpack.c.l.b16 %v489
    %v850 = vunpack.c.h.b16 %v489
    %v851 = vunpack.c.l.b16 %v490
    %v852 = vunpack.c.h.b16 %v490
    %v853 = vunpack.c.l.b16 %v491
    %v854 = vunpack.c.h.b16 %v491
    %v855 = vunpack.c.l.b16 %v492
    %v856 = vunpack.c.h.b16 %v492
    %v857 = vunpack.c.l.b16 %v493
    %v858 = vunpack.c.h.b16 %v493
    %v859 = vunpack.c.l.b16 %v494
    %v860 = vunpack.c.h.b16 %v494
    %v861 = vunpack.c.l.b16 %v495
    %v862 = vunpack.c.h.b16 %v495
    %v863 = vunpack.c.l.b16 %v496
    %v864 = vunpack.c.h.b16 %v496
    %v865 = vunpack.c.l.b16 %v497
    %v866 = vunpack.c.h.b16 %v497
    %v867 = vunpack.c.l.b16 %v498
    %v868 = vunpack.c.h.b16 %v498
    %v869 = vunpack.c.l.b16 %v499
    %v870 = vunpack.c.h.b16 %v499
    %v871 = vunpack.c.l.b16 %v500
    %v872 = vunpack.c.h.b16 %v500
    %v873 = vunpack.c.l.b16 %v501
    %v874 = vunpack.c.h.b16 %v501
    %v875 = vunpack.c.l.b16 %v502
    %v876 = vunpack.c.h.b16 %v502
    %v877 = vunpack.c.l.b16 %v503
    %v878 = vunpack.c.h.b16 %v503
    %v879 = vunpack.c.l.b16 %v504
    %v880 = vunpack.c.h.b16 %v504
    %v881 = vunpack.c.l.b16 %v505
    %v882 = vunpack.c.h.b16 %v505
    %v883 = vunpack.c.l.b16 %v506
    %v884 = vunpack.c.h.b16 %v506
    %v885 = vunpack.c.l.b16 %v507
    %v886 = vunpack.c.h.b16 %v507
    %v887 = vunpack.c.l.b16 %v508
    %v888 = vunpack.c.h.b16 %v508
    %v889 = vunpack.c.l.b16 %v509
    %v890 = vunpack.c.h.b16 %v509
    %v891 = vunpack.c.l.b16 %v510
    %v892 = vunpack.c.h.b16 %v510
    %v893 = vunpack.c.l.b16 %v511
    %v894 = vunpack.c.h.b16 %v511
    %v895 = vunpack.c.l.b16 %v512
    %v896 = vunpack.c.h.b16 %v512
    %v897 = vunpack.c.l.b16 %v513
    %v898 = vunpack.c.h.b16 %v513
    %v899 = vunpack.c.l.b16 %v514
    %v900 = vunpack.c.h.b16 %v514
    %v901 = vunpack.c.l.b16 %v515
    %v902 = vunpack.c.h.b16 %v515
    %v903 = vunpack.c.l.b16 %v516
    %v904 = vunpack.c.h.b16 %v516
    %v905 = vunpack.c.l.b16 %v517
    %v906 = vunpack.c.h.b16 %v517
    %v907 = vunpack.c.l.b16 %v518
    %v908 = vunpack.c.h.b16 %v518
    %v909 = vunpack.c.l.b16 %v519
    %v910 = vunpack.c.h.b16 %v519
    %v911 = vunpack.c.l.b16 %v520
    %v912 = vunpack.c.h.b16 %v520
    %v913 = vunpack.c.l.b16 %v521
    %v914 = vunpack.c.h.b16 %v521
    %v915 = vunpack.c.l.b16 %v522
    %v916 = vunpack.c.h.b16 %v522
    %v917 = vunpack.c.l.b16 %v523
    %v918 = vunpack.c.h.b16 %v523
    %v919 = vunpack.c.l.b16 %v524
    %v920 = vunpack.c.h.b16 %v524
    %v921 = vunpack.c.l.b16 %v525
    %v922 = vunpack.c.h.b16 %v525
    %v923 = vunpack.c.l.b16 %v526
    %v924 = vunpack.c.h.b16 %v526
    %v925 = vunpack.c.l.b16 %v527
    %v926 = vunpack.c.h.b16 %v527
    %v927 = vunpack.c.l.b16 %v528
    %v928 = vunpack.c.h.b16 %v528
    %v929 = vunpack.c.l.b16 %v529
    %v930 = vunpack.c.h.b16 %v529
    %v931 = vunpack.c.l.b16 %v530
    %v932 = vunpack.c.h.b16 %v530
    %v933 = vunpack.c.l.b16 %v531
    %v934 = vunpack.c.h.b16 %v531
    %v935 = vunpack.c.l.b16 %v532
    %v936 = vunpack.c.h.b16 %v532
    %v937 = vunpack.c.l.b16 %v533
    %v938 = vunpack.c.h.b16 %v533
    %v939 = vunpack.c.l.b16 %v534
    %v940 = vunpack.c.h.b16 %v534
    %v941 = vunpack.c.l.b16 %v535
    %v942 = vunpack.c.h.b16 %v535
    %v943 = vunpack.c.l.b16 %v536
    %v944 = vunpack.c.h.b16 %v536
    %v945 = vunpack.c.l.b16 %v537
    %v946 = vunpack.c.h.b16 %v537
    %v947 = vunpack.c.l.b16 %v538
    %v948 = vunpack.c.h.b16 %v538
    %v949 = vunpack.c.l.b16 %v539
    %v950 = vunpack.c.h.b16 %v539
    %v951 = vunpack.c.l.b16 %v540
    %v952 = vunpack.c.h.b16 %v540
    %v953 = vunpack.c.l.b16 %v541
    %v954 = vunpack.c.h.b16 %v541
    %v955 = vunpack.c.l.b16 %v542
    %v956 = vunpack.c.h.b16 %v542
    %v957 = vunpack.c.l.b16 %v543
    %v958 = vunpack.c.h.b16 %v543
    %v959 = vunpack.c.l.b16 %v544
    %v960 = vunpack.c.h.b16 %v544
    %v961 = vunpack.c.l.b16 %v545
    %v962 = vunpack.c.h.b16 %v545
    %v963 = vunpack.c.l.b16 %v546
    %v964 = vunpack.c.h.b16 %v546
    %v965 = vunpack.c.l.b16 %v547
    %v966 = vunpack.c.h.b16 %v547
    %v967 = vunpack.c.l.b16 %v548
    %v968 = vunpack.c.h.b16 %v548
    %v969 = vunpack.c.l.b16 %v549
    %v970 = vunpack.c.h.b16 %v549
    %v971 = vunpack.c.l.b16 %v550
    %v972 = vunpack.c.h.b16 %v550
    %v973 = vunpack.c.l.b16 %v551
    %v974 = vunpack.c.h.b16 %v551
    %v975 = vunpack.c.l.b16 %v552
    %v976 = vunpack.c.h.b16 %v552
    %v977 = vunpack.c.l.b16 %v553
    %v978 = vunpack.c.h.b16 %v553
    %v979 = vunpack.c.l.b16 %v554
    %v980 = vunpack.c.h.b16 %v554
    %v981 = vunpack.c.l.b16 %v555
    %v982 = vunpack.c.h.b16 %v555
    %v983 = vunpack.c.l.b16 %v556
    %v984 = vunpack.c.h.b16 %v556
    %v985 = vunpack.c.l.b16 %v557
    %v986 = vunpack.c.h.b16 %v557
    %v987 = vunpack.c.l.b16 %v558
    %v988 = vunpack.c.h.b16 %v558
    %v989 = vunpack.c.l.b16 %v559
    %v990 = vunpack.c.h.b16 %v559
    %v991 = vunpack.c.l.b16 %v560
    %v992 = vunpack.c.h.b16 %v560
    %v993 = vpack.c.b16 %v711, %v705
    %v994 = vpack.c.b16 %v712, %v706
    %v995 = vpack.c.b16 %v713, %v707
    %v996 = vpack.c.b16 %v714, %v708
    %v997 = vpack.c.b16 %v715, %v709
    %v998 = vpack.c.b16 %v716, %v710
    %v999 = vpack.c.b16 %v723, %v717
    %v1000 = vpack.c.b16 %v724, %v718
    %v1001 = vpack.c.b16 %v725, %v719
    %v1002 = vpack.c.b16 %v726, %v720
    %v1003 = vpack.c.b16 %v727, %v721
    %v1004 = vpack.c.b16 %v728, %v722
    %v1005 = vpack.c.b16 %v735, %v729
    %v1006 = vpack.c.b16 %v736, %v730
    %v1007 = vpack.c.b16 %v737, %v731
    %v1008 = vpack.c.b16 %v738, %v732
    %v1009 = vpack.c.b16 %v739, %v733
    %v1010 = vpack.c.b16 %v740, %v734
    %v1011 = vpack.c.b16 %v747, %v741
    %v1012 = vpack.c.b16 %v748, %v742
    %v1013 = vpack.c.b16 %v749, %v743
    %v1014 = vpack.c.b16 %v750, %v744
    %v1015 = vpack.c.b16 %v751, %v745
    %v1016 = vpack.c.b16 %v752, %v746
    %v1017 = vpack.c.b16 %v759, %v753
    %v1018 = vpack.c.b16 %v760, %v754
    %v1019 = vpack.c.b16 %v761, %v755
    %v1020 = vpack.c.b16 %v762, %v756
    %v1021 = vpack.c.b16 %v763, %v757
    %v1022 = vpack.c.b16 %v764, %v758
    %v1023 = vpack.c.b16 %v771, %v765
    %v1024 = vpack.c.b16 %v772, %v766
    %v1025 = vpack.c.b16 %v773, %v767
    %v1026 = vpack.c.b16 %v774, %v768
    %v1027 = vpack.c.b16 %v775, %v769
    %v1028 = vpack.c.b16 %v776, %v770
    %v1029 = vpack.c.b16 %v783, %v777
    %v1030 = vpack.c.b16 %v784, %v778
    %v1031 = vpack.c.b16 %v785, %v779
    %v1032 = vpack.c.b16 %v786, %v780
    %v1033 = vpack.c.b16 %v787, %v781
    %v1034 = vpack.c.b16 %v788, %v782
    %v1035 = vpack.c.b16 %v795, %v789
    %v1036 = vpack.c.b16 %v796, %v790
    %v1037 = vpack.c.b16 %v797, %v791
    %v1038 = vpack.c.b16 %v798, %v792
    %v1039 = vpack.c.b16 %v799, %v793
    %v1040 = vpack.c.b16 %v800, %v794
    %v1041 = vpack.c.b16 %v807, %v801
    %v1042 = vpack.c.b16 %v808, %v802
    %v1043 = vpack.c.b16 %v809, %v803
    %v1044 = vpack.c.b16 %v810, %v804
    %v1045 = vpack.c.b16 %v811, %v805
    %v1046 = vpack.c.b16 %v812, %v806
    %v1047 = vpack.c.b16 %v819, %v813
    %v1048 = vpack.c.b16 %v820, %v814
    %v1049 = vpack.c.b16 %v821, %v815
    %v1050 = vpack.c.b16 %v822, %v816
    %v1051 = vpack.c.b16 %v823, %v817
    %v1052 = vpack.c.b16 %v824, %v818
    %v1053 = vpack.c.b16 %v831, %v825
    %v1054 = vpack.c.b16 %v832, %v826
    %v1055 = vpack.c.b16 %v833, %v827
    %v1056 = vpack.c.b16 %v834, %v828
    %v1057 = vpack.c.b16 %v835, %v829
    %v1058 = vpack.c.b16 %v836, %v830
    %v1059 = vpack.c.b16 %v843, %v837
    %v1060 = vpack.c.b16 %v844, %v838
    %v1061 = vpack.c.b16 %v845, %v839
    %v1062 = vpack.c.b16 %v846, %v840
    %v1063 = vpack.c.b16 %v847, %v841
    %v1064 = vpack.c.b16 %v848, %v842
    %v1065 = vpack.c.b16 %v855, %v849
    %v1066 = vpack.c.b16 %v856, %v850
    %v1067 = vpack.c.b16 %v857, %v851
    %v1068 = vpack.c.b16 %v858, %v852
    %v1069 = vpack.c.b16 %v859, %v853
    %v1070 = vpack.c.b16 %v860, %v854
    %v1071 = vpack.c.b16 %v867, %v861
    %v1072 = vpack.c.b16 %v868, %v862
    %v1073 = vpack.c.b16 %v869, %v863
    %v1074 = vpack.c.b16 %v870, %v864
    %v1075 = vpack.c.b16 %v871, %v865
    %v1076 = vpack.c.b16 %v872, %v866
    %v1077 = vpack.c.b16 %v879, %v873
    %v1078 = vpack.c.b16 %v880, %v874
    %v1079 = vpack.c.b16 %v881, %v875
    %v1080 = vpack.c.b16 %v882, %v876
    %v1081 = vpack.c.b16 %v883, %v877
    %v1082 = vpack.c.b16 %v884, %v878
    %v1083 = vpack.c.b16 %v891, %v885
    %v1084 = vpack.c.b16 %v892, %v886
    %v1085 = vpack.c.b16 %v893, %v887
    %v1086 = vpack.c.b16 %v894, %v888
    %v1087 = vpack.c.b16 %v895, %v889
    %v1088 = vpack.c.b16 %v896, %v890
    %v1089 = vpack.c.b16 %v903, %v897
    %v1090 = vpack.c.b16 %v904, %v898
    %v1091 = vpack.c.b16 %v905, %v899
    %v1092 = vpack.c.b16 %v906, %v900
    %v1093 = vpack.c.b16 %v907, %v901
    %v1094 = vpack.c.b16 %v908, %v902
    %v1095 = vpack.c.b16 %v915, %v909
    %v1096 = vpack.c.b16 %v916, %v910
    %v1097 = vpack.c.b16 %v917, %v911
    %v1098 = vpack.c.b16 %v918, %v912
    %v1099 = vpack.c.b16 %v919, %v913
    %v1100 = vpack.c.b16 %v920, %v914
    %v1101 = vpack.c.b16 %v927, %v921
    %v1102 = vpack.c.b16 %v928, %v922
    %v1103 = vpack.c.b16 %v929, %v923
    %v1104 = vpack.c.b16 %v930, %v924
    %v1105 = vpack.c.b16 %v931, %v925
    %v1106 = vpack.c.b16 %v932, %v926
    %v1107 = vpack.c.b16 %v939, %v933
    %v1108 = vpack.c.b16 %v940, %v934
    %v1109 = vpack.c.b16 %v941, %v935
    %v1110 = vpack.c.b16 %v942, %v936
    %v1111 = vpack.c.b16 %v943, %v937
    %v1112 = vpack.c.b16 %v944, %v938
    %v1113 = vpack.c.b16 %v951, %v945
    %v1114 = vpack.c.b16 %v952, %v946
    %v1115 = vpack.c.b16 %v953, %v947
    %v1116 = vpack.c.b16 %v954, %v948
    %v1117 = vpack.c.b16 %v955, %v949
    %v1118 = vpack.c.b16 %v956, %v950
    %v1119 = vpack.c.b16 %v963, %v957
    %v1120 = vpack.c.b16 %v964, %v958
    %v1121 = vpack.c.b16 %v965, %v959
    %v1122 = vpack.c.b16 %v966, %v960
    %v1123 = vpack.c.b16 %v967, %v961
    %v1124 = vpack.c.b16 %v968, %v962
    %v1125 = vpack.c.b16 %v975, %v969
    %v1126 = vpack.c.b16 %v976, %v970
    %v1127 = vpack.c.b16 %v977, %v971
    %v1128 = vpack.c.b16 %v978, %v972
    %v1129 = vpack.c.b16 %v979, %v973
    %v1130 = vpack.c.b16 %v980, %v974
    %v1131 = vpack.c.b16 %v987, %v981
    %v1132 = vpack.c.b16 %v988, %v982
    %v1133 = vpack.c.b16 %v989, %v983
    %v1134 = vpack.c.b16 %v990, %v984
    %v1135 = vpack.c.b16 %v991, %v985
    %v1136 = vpack.c.b16 %v992, %v986
    %1281 = vmatprep.subr.bf16.mxu0 %v994
    %1282 = vmatpush1.bf16.msra.mxu0 %v993
    %1283 = vmatprep.subr.bf16.mxu0 %v1000
    %1284 = vmatpush1.bf16.msra.mxu0 %v999
    %1285 = vmatprep.subr.bf16.mxu0 %v1006
    %1286 = vmatpush1.bf16.msra.mxu0 %v1005
    %1287 = vmatprep.subr.bf16.mxu0 %v1012
    %1288 = vmatpush1.bf16.msra.mxu0 %v1011
    %1289 = vmatprep.subr.bf16.mxu0 %v1018
    %1290 = vmatpush1.bf16.msra.mxu0 %v1017
    %1291 = vmatprep.subr.bf16.mxu0 %v1024
    %1292 = vmatpush1.bf16.msra.mxu0 %v1023
    %1293 = vmatprep.subr.bf16.mxu0 %v1030
    %1294 = vmatpush1.bf16.msra.mxu0 %v1029
    %1295 = vmatprep.subr.bf16.mxu0 %v1036
    %1296 = vmatpush1.bf16.msra.mxu0 %v1035
    %1297 = vmatprep.subr.bf16.mxu0 %v1042
    %1298 = vmatpush1.bf16.msra.mxu0 %v1041
    %1299 = vmatprep.subr.bf16.mxu0 %v1048
    %1300 = vmatpush1.bf16.msra.mxu0 %v1047
    %1301 = vmatprep.subr.bf16.mxu0 %v1054
    %1302 = vmatpush1.bf16.msra.mxu0 %v1053
    %1303 = vmatprep.subr.bf16.mxu0 %v1060
    %1304 = vmatpush1.bf16.msra.mxu0 %v1059
    %1305 = vmatprep.subr.bf16.mxu0 %v1066
    %1306 = vmatpush1.bf16.msra.mxu0 %v1065
    %1307 = vmatprep.subr.bf16.mxu0 %v1072
    %1308 = vmatpush1.bf16.msra.mxu0 %v1071
    %1309 = vmatprep.subr.bf16.mxu0 %v1078
    %1310 = vmatpush1.bf16.msra.mxu0 %v1077
    %1311 = vmatprep.subr.bf16.mxu0 %v1084
    %1312 = vmatpush1.bf16.msra.mxu0 %v1083
    %1313 = vmatprep.mubr.bf16.mxu0 %v415
    %1314 = vmatmul.mubr.bf16.gmra.mrb[0].mxu0 %v414
    %v1315 = vpop.f32.mrb[0].mxu0
    %v1316 = vadd.f32 0.0, %v1315
    %v1317 = vpop.f32.mrb[0].mxu0
    %v1318 = vadd.f32 0.0, %v1317
    %v1319 = vpop.f32.mrb[0].mxu0
    %v1320 = vpop.f32.mrb[0].mxu0
    %1321 = vdwg.mxu0
    %1322 = vmatprep.subr.bf16.mxu0 %v1090
    %1323 = vmatpush1.bf16.msra.mxu0 %v1089
    %1324 = vmatprep.subr.bf16.mxu0 %v1096
    %1325 = vmatpush1.bf16.msra.mxu0 %v1095
    %1326 = vmatprep.subr.bf16.mxu0 %v1102
    %1327 = vmatpush1.bf16.msra.mxu0 %v1101
    %1328 = vmatprep.subr.bf16.mxu0 %v1108
    %1329 = vmatpush1.bf16.msra.mxu0 %v1107
    %1330 = vmatprep.subr.bf16.mxu0 %v1114
    %1331 = vmatpush1.bf16.msra.mxu0 %v1113
    %1332 = vmatprep.subr.bf16.mxu0 %v1120
    %1333 = vmatpush1.bf16.msra.mxu0 %v1119
    %1334 = vmatprep.subr.bf16.mxu0 %v1126
    %1335 = vmatpush1.bf16.msra.mxu0 %v1125
    %1336 = vmatprep.subr.bf16.mxu0 %v1132
    %1337 = vmatpush1.bf16.msra.mxu0 %v1131
    %1338 = vmatprep.subr.bf16.mxu0 0
    %1339 = vmatpush1.bf16.msra.mxu0 0
    %1340 = vmatprep.subr.bf16.mxu0 0
    %1341 = vmatpush1.bf16.msra.mxu0 0
    %1342 = vmatprep.subr.bf16.mxu0 0
    %1343 = vmatpush1.bf16.msra.mxu0 0
    %1344 = vmatprep.subr.bf16.mxu0 0
    %1345 = vmatpush1.bf16.msra.mxu0 0
    %1346 = vmatprep.subr.bf16.mxu0 0
    %1347 = vmatpush1.bf16.msra.mxu0 0
    %1348 = vmatprep.subr.bf16.mxu0 0
    %1349 = vmatpush1.bf16.msra.mxu0 0
    %1350 = vmatprep.subr.bf16.mxu0 0
    %1351 = vmatpush1.bf16.msra.mxu0 0
    %1352 = vmatprep.subr.bf16.mxu0 0
    %1353 = vmatpush1.bf16.msra.mxu0 0
    %1354 = vmatprep.mubr.bf16.mxu0 0
    %1355 = vmatmul.mubr.bf16.gmra.mrb[0].mxu0 %v416
    %v1356 = vpop.f32.mrb[0].mxu0
    %v1357 = vadd.f32 %v1316, %v1356
    %v1358 = vpop.f32.mrb[0].mxu0
    %v1359 = vadd.f32 %v1318, %v1358
    %v1360 = vpop.f32.mrb[0].mxu0
    %v1361 = vpop.f32.mrb[0].mxu0
    %1362 = vdwg.mxu0
    %1363 = vmatprep.subr.bf16.mxu0 %v996
    %1364 = vmatpush1.bf16.msra.mxu0 %v995
    %1365 = vmatprep.subr.bf16.mxu0 %v1002
    %1366 = vmatpush1.bf16.msra.mxu0 %v1001
    %1367 = vmatprep.subr.bf16.mxu0 %v1008
    %1368 = vmatpush1.bf16.msra.mxu0 %v1007
    %1369 = vmatprep.subr.bf16.mxu0 %v1014
    %1370 = vmatpush1.bf16.msra.mxu0 %v1013
    %1371 = vmatprep.subr.bf16.mxu0 %v1020
    %1372 = vmatpush1.bf16.msra.mxu0 %v1019
    %1373 = vmatprep.subr.bf16.mxu0 %v1026
    %1374 = vmatpush1.bf16.msra.mxu0 %v1025
    %1375 = vmatprep.subr.bf16.mxu0 %v1032
    %1376 = vmatpush1.bf16.msra.mxu0 %v1031
    %1377 = vmatprep.subr.bf16.mxu0 %v1038
    %1378 = vmatpush1.bf16.msra.mxu0 %v1037
    %1379 = vmatprep.subr.bf16.mxu0 %v1044
    %1380 = vmatpush1.bf16.msra.mxu0 %v1043
    %1381 = vmatprep.subr.bf16.mxu0 %v1050
    %1382 = vmatpush1.bf16.msra.mxu0 %v1049
    %1383 = vmatprep.subr.bf16.mxu0 %v1056
    %1384 = vmatpush1.bf16.msra.mxu0 %v1055
    %1385 = vmatprep.subr.bf16.mxu0 %v1062
    %1386 = vmatpush1.bf16.msra.mxu0 %v1061
    %1387 = vmatprep.subr.bf16.mxu0 %v1068
    %1388 = vmatpush1.bf16.msra.mxu0 %v1067
    %1389 = vmatprep.subr.bf16.mxu0 %v1074
    %1390 = vmatpush1.bf16.msra.mxu0 %v1073
    %1391 = vmatprep.subr.bf16.mxu0 %v1080
    %1392 = vmatpush1.bf16.msra.mxu0 %v1079
    %1393 = vmatprep.subr.bf16.mxu0 %v1086
    %1394 = vmatpush1.bf16.msra.mxu0 %v1085
    %1395 = vmatprep.mubr.bf16.mxu0 %v415
    %1396 = vmatmul.mubr.bf16.gmra.mrb[0].mxu0 %v414
    %v1397 = vpop.f32.mrb[0].mxu0
    %v1398 = vadd.f32 0.0, %v1397
    %v1399 = vpop.f32.mrb[0].mxu0
    %v1400 = vadd.f32 0.0, %v1399
    %v1401 = vpop.f32.mrb[0].mxu0
    %v1402 = vpop.f32.mrb[0].mxu0
    %1403 = vdwg.mxu0
    %1404 = vmatprep.subr.bf16.mxu0 %v1092
    %1405 = vmatpush1.bf16.msra.mxu0 %v1091
    %1406 = vmatprep.subr.bf16.mxu0 %v1098
    %1407 = vmatpush1.bf16.msra.mxu0 %v1097
    %1408 = vmatprep.subr.bf16.mxu0 %v1104
    %1409 = vmatpush1.bf16.msra.mxu0 %v1103
    %1410 = vmatprep.subr.bf16.mxu0 %v1110
    %1411 = vmatpush1.bf16.msra.mxu0 %v1109
    %1412 = vmatprep.subr.bf16.mxu0 %v1116
    %1413 = vmatpush1.bf16.msra.mxu0 %v1115
    %1414 = vmatprep.subr.bf16.mxu0 %v1122
    %1415 = vmatpush1.bf16.msra.mxu0 %v1121
    %1416 = vmatprep.subr.bf16.mxu0 %v1128
    %1417 = vmatpush1.bf16.msra.mxu0 %v1127
    %1418 = vmatprep.subr.bf16.mxu0 %v1134
    %1419 = vmatpush1.bf16.msra.mxu0 %v1133
    %1420 = vmatprep.subr.bf16.mxu0 0
    %1421 = vmatpush1.bf16.msra.mxu0 0
    %1422 = vmatprep.subr.bf16.mxu0 0
    %1423 = vmatpush1.bf16.msra.mxu0 0
    %1424 = vmatprep.subr.bf16.mxu0 0
    %1425 = vmatpush1.bf16.msra.mxu0 0
    %1426 = vmatprep.subr.bf16.mxu0 0
    %1427 = vmatpush1.bf16.msra.mxu0 0
    %1428 = vmatprep.subr.bf16.mxu0 0
    %1429 = vmatpush1.bf16.msra.mxu0 0
    %1430 = vmatprep.subr.bf16.mxu0 0
    %1431 = vmatpush1.bf16.msra.mxu0 0
    %1432 = vmatprep.subr.bf16.mxu0 0
    %1433 = vmatpush1.bf16.msra.mxu0 0
    %1434 = vmatprep.subr.bf16.mxu0 0
    %1435 = vmatpush1.bf16.msra.mxu0 0
    %1436 = vmatprep.mubr.bf16.mxu0 0
    %1437 = vmatmul.mubr.bf16.gmra.mrb[0].mxu0 %v416
    %v1438 = vpop.f32.mrb[0].mxu0
    %v1439 = vadd.f32 %v1398, %v1438
    %v1440 = vpop.f32.mrb[0].mxu0
    %v1441 = vadd.f32 %v1400, %v1440
    %v1442 = vpop.f32.mrb[0].mxu0
    %v1443 = vpop.f32.mrb[0].mxu0
    %1444 = vdwg.mxu0
    %1445 = vmatprep.subr.bf16.mxu0 %v998
    %1446 = vmatpush1.bf16.msra.mxu0 %v997
    %1447 = vmatprep.subr.bf16.mxu0 %v1004
    %1448 = vmatpush1.bf16.msra.mxu0 %v1003
    %1449 = vmatprep.subr.bf16.mxu0 %v1010
    %1450 = vmatpush1.bf16.msra.mxu0 %v1009
    %1451 = vmatprep.subr.bf16.mxu0 %v1016
    %1452 = vmatpush1.bf16.msra.mxu0 %v1015
    %1453 = vmatprep.subr.bf16.mxu0 %v1022
    %1454 = vmatpush1.bf16.msra.mxu0 %v1021
    %1455 = vmatprep.subr.bf16.mxu0 %v1028
    %1456 = vmatpush1.bf16.msra.mxu0 %v1027
    %1457 = vmatprep.subr.bf16.mxu0 %v1034
    %1458 = vmatpush1.bf16.msra.mxu0 %v1033
    %1459 = vmatprep.subr.bf16.mxu0 %v1040
    %1460 = vmatpush1.bf16.msra.mxu0 %v1039
    %1461 = vmatprep.subr.bf16.mxu0 %v1046
    %1462 = vmatpush1.bf16.msra.mxu0 %v1045
    %1463 = vmatprep.subr.bf16.mxu0 %v1052
    %1464 = vmatpush1.bf16.msra.mxu0 %v1051
    %1465 = vmatprep.subr.bf16.mxu0 %v1058
    %1466 = vmatpush1.bf16.msra.mxu0 %v1057
    %1467 = vmatprep.subr.bf16.mxu0 %v1064
    %1468 = vmatpush1.bf16.msra.mxu0 %v1063
    %1469 = vmatprep.subr.bf16.mxu0 %v1070
    %1470 = vmatpush1.bf16.msra.mxu0 %v1069
    %1471 = vmatprep.subr.bf16.mxu0 %v1076
    %1472 = vmatpush1.bf16.msra.mxu0 %v1075
    %1473 = vmatprep.subr.bf16.mxu0 %v1082
    %1474 = vmatpush1.bf16.msra.mxu0 %v1081
    %1475 = vmatprep.subr.bf16.mxu0 %v1088
    %1476 = vmatpush1.bf16.msra.mxu0 %v1087
    %1477 = vmatprep.mubr.bf16.mxu0 %v415
    %1478 = vmatmul.mubr.bf16.gmra.mrb[0].mxu0 %v414
    %v1479 = vpop.f32.mrb[0].mxu0
    %v1480 = vadd.f32 0.0, %v1479
    %v1481 = vpop.f32.mrb[0].mxu0
    %v1482 = vadd.f32 0.0, %v1481
    %v1483 = vpop.f32.mrb[0].mxu0
    %v1484 = vpop.f32.mrb[0].mxu0
    %1485 = vdwg.mxu0
    %1486 = vmatprep.subr.bf16.mxu0 %v1094
    %1487 = vmatpush1.bf16.msra.mxu0 %v1093
    %1488 = vmatprep.subr.bf16.mxu0 %v1100
    %1489 = vmatpush1.bf16.msra.mxu0 %v1099
    %1490 = vmatprep.subr.bf16.mxu0 %v1106
    %1491 = vmatpush1.bf16.msra.mxu0 %v1105
    %1492 = vmatprep.subr.bf16.mxu0 %v1112
    %1493 = vmatpush1.bf16.msra.mxu0 %v1111
    %1494 = vmatprep.subr.bf16.mxu0 %v1118
    %1495 = vmatpush1.bf16.msra.mxu0 %v1117
    %1496 = vmatprep.subr.bf16.mxu0 %v1124
    %1497 = vmatpush1.bf16.msra.mxu0 %v1123
    %1498 = vmatprep.subr.bf16.mxu0 %v1130
    %1499 = vmatpush1.bf16.msra.mxu0 %v1129
    %1500 = vmatprep.subr.bf16.mxu0 %v1136
    %1501 = vmatpush1.bf16.msra.mxu0 %v1135
    %1502 = vmatprep.subr.bf16.mxu0 0
    %1503 = vmatpush1.bf16.msra.mxu0 0
    %1504 = vmatprep.subr.bf16.mxu0 0
    %1505 = vmatpush1.bf16.msra.mxu0 0
    %1506 = vmatprep.subr.bf16.mxu0 0
    %1507 = vmatpush1.bf16.msra.mxu0 0
    %1508 = vmatprep.subr.bf16.mxu0 0
    %1509 = vmatpush1.bf16.msra.mxu0 0
    %1510 = vmatprep.subr.bf16.mxu0 0
    %1511 = vmatpush1.bf16.msra.mxu0 0
    %1512 = vmatprep.subr.bf16.mxu0 0
    %1513 = vmatpush1.bf16.msra.mxu0 0
    %1514 = vmatprep.subr.bf16.mxu0 0
    %1515 = vmatpush1.bf16.msra.mxu0 0
    %1516 = vmatprep.subr.bf16.mxu0 0
    %1517 = vmatpush1.bf16.msra.mxu0 0
    %1518 = vmatprep.mubr.bf16.mxu0 0
    %1519 = vmatmul.mubr.bf16.gmra.mrb[0].mxu0 %v416
    %v1520 = vpop.f32.mrb[0].mxu0
    %v1521 = vadd.f32 %v1480, %v1520
    %v1522 = vpop.f32.mrb[0].mxu0
    %v1523 = vadd.f32 %v1482, %v1522
    %v1524 = vpop.f32.mrb[0].mxu0
    %v1525 = vpop.f32.mrb[0].mxu0
    %1526 = vdwg.mxu0
    %v1527 = vld [vmem:[#allocation10] sm:$0x7]
    %v1529 = vlaneseq
    %v1530 = vshrl.u32 %v1529, 7
    %v1531 = vsub.s32 0, %v1530
    %v1532 = vrot.slane %v1527, %v1531
    %v1533 = vlaneseq
    %v1534 = vshrl.u32 %v1533, 7
    %v1535 = vsub.s32 1, %v1534
    %v1536 = vrot.slane %v1527, %v1535
    %v1537 = vlaneseq
    %v1538 = vshrl.u32 %v1537, 7
    %v1539 = vsub.s32 2, %v1538
    %v1540 = vrot.slane %v1527, %v1539
    %v1544 = vadd.f32 %v1357, %v1532
    %v1545 = vadd.f32 %v1359, %v1536
    %v1546 = vadd.f32 %v1439, %v1540
    %v1547 = vmax.f32 %v1544, 0.0
    %v1548 = vmax.f32 %v1545, 0.0
    %v1549 = vmax.f32 %v1546, 0.0
    %v1550 = vadd.f32 %v1441, %v326
    %v1551 = vadd.f32 %v1521, %v365
    %v1552 = vadd.f32 %v1523, %v367
    %v1553 = vmax.f32 %v1550, 0.0
    %v1554 = vmax.f32 %v1551, 0.0
    %v1555 = vmax.f32 %v1552, 0.0
    %v1556 = vpack.c.bf16 %v1553, %v1553
    %v1557 = vpack.c.bf16 %v1554, %v1554
    %v1558 = vpack.c.bf16 %v1555, %v1555
    %s1559 = scalar_lea.vmem [#allocation8], 1152
    %v1560 = vld [vmem:[%s1559] sm:$0xff]
    %v1561 = vld [vmem:[%s1559 + $0x8] sm:$0xff]
    %v1562 = vld [vmem:[%s1559 + $0x18] sm:$0xff]
    %v1563 = vld [vmem:[%s1559 + $0x20] sm:$0xff]
    %v1564 = vld [vmem:[%s1559 + $0x30] sm:$0xff]
    %v1565 = vld [vmem:[%s1559 + $0x38] sm:$0xff]
    %v1566 = vld [vmem:[%s1559 + $0x48] sm:$0xff]
    %v1567 = vld [vmem:[%s1559 + $0x50] sm:$0xff]
    %v1568 = vld [vmem:[%s1559 + $0x60] sm:$0xff]
    %v1569 = vld [vmem:[%s1559 + $0x68] sm:$0xff]
    %v1570 = vld [vmem:[%s1559 + $0x78] sm:$0xff]
    %v1571 = vld [vmem:[%s1559 + $0x80] sm:$0xff]
    %v1572 = vld [vmem:[%s1559 + $0x90] sm:$0xff]
    %v1573 = vld [vmem:[%s1559 + $0x98] sm:$0xff]
    %v1574 = vld [vmem:[%s1559 + $0xa8] sm:$0xff]
    %v1575 = vld [vmem:[%s1559 + $0xb0] sm:$0xff]
    %v1576 = vld [vmem:[%s1559 + $0xc0] sm:$0xff]
    %v1577 = vld [vmem:[%s1559 + $0xc8] sm:$0xff]
    %v1578 = vld [vmem:[%s1559 + $0xd8] sm:$0xff]
    %v1579 = vld [vmem:[%s1559 + $0xe0] sm:$0xff]
    %v1580 = vld [vmem:[%s1559 + $0xf0] sm:$0xff]
    %v1581 = vld [vmem:[%s1559 + $0xf8] sm:$0xff]
    %v1582 = vld [vmem:[%s1559 + $0x108] sm:$0xff]
    %v1583 = vld [vmem:[%s1559 + $0x110] sm:$0xff]
    %v1584 = vld [vmem:[%s1559 + $0x120] sm:$0xff]
    %v1585 = vld [vmem:[%s1559 + $0x128] sm:$0xff]
    %v1586 = vld [vmem:[%s1559 + $0x138] sm:$0xff]
    %v1587 = vld [vmem:[%s1559 + $0x140] sm:$0xff]
    %v1588 = vld [vmem:[%s1559 + $0x150] sm:$0xff]
    %v1589 = vld [vmem:[%s1559 + $0x158] sm:$0xff]
    %v1590 = vld [vmem:[%s1559 + $0x168] sm:$0xff]
    %v1591 = vld [vmem:[%s1559 + $0x170] sm:$0xff]
    %v1592 = vld [vmem:[%s1559 + $0x180] sm:$0xff]
    %v1593 = vld [vmem:[%s1559 + $0x188] sm:$0xff]
    %v1594 = vld [vmem:[%s1559 + $0x198] sm:$0xff]
    %v1595 = vld [vmem:[%s1559 + $0x1a0] sm:$0xff]
    %v1596 = vld [vmem:[%s1559 + $0x1b0] sm:$0xff]
    %v1597 = vld [vmem:[%s1559 + $0x1b8] sm:$0xff]
    %v1598 = vld [vmem:[%s1559 + $0x1c8] sm:$0xff]
    %v1599 = vld [vmem:[%s1559 + $0x1d0] sm:$0xff]
    %v1600 = vld [vmem:[%s1559 + $0x1e0] sm:$0xff]
    %v1601 = vld [vmem:[%s1559 + $0x1e8] sm:$0xff]
    %v1602 = vld [vmem:[%s1559 + $0x1f8] sm:$0xff]
    %v1603 = vld [vmem:[%s1559 + $0x200] sm:$0xff]
    %v1604 = vld [vmem:[%s1559 + $0x210] sm:$0xff]
    %v1605 = vld [vmem:[%s1559 + $0x218] sm:$0xff]
    %v1606 = vld [vmem:[%s1559 + $0x228] sm:$0xff]
    %v1607 = vld [vmem:[%s1559 + $0x230] sm:$0xff]
    %v1608 = vld [vmem:[%s1559 + $0x240] sm:$0xff]
    %v1609 = vld [vmem:[%s1559 + $0x248] sm:$0xff]
    %v1610 = vld [vmem:[%s1559 + $0x258] sm:$0xff]
    %v1611 = vld [vmem:[%s1559 + $0x260] sm:$0xff]
    %v1612 = vld [vmem:[%s1559 + $0x270] sm:$0xff]
    %v1613 = vld [vmem:[%s1559 + $0x278] sm:$0xff]
    %v1614 = vld [vmem:[%s1559 + $0x288] sm:$0xff]
    %v1615 = vld [vmem:[%s1559 + $0x290] sm:$0xff]
    %v1616 = vld [vmem:[%s1559 + $0x2a0] sm:$0xff]
    %v1617 = vld [vmem:[%s1559 + $0x2a8] sm:$0xff]
    %v1618 = vld [vmem:[%s1559 + $0x2b8] sm:$0xff]
    %v1619 = vld [vmem:[%s1559 + $0x2c0] sm:$0xff]
    %v1620 = vld [vmem:[%s1559 + $0x2d0] sm:$0xff]
    %v1621 = vld [vmem:[%s1559 + $0x2d8] sm:$0xff]
    %v1622 = vld [vmem:[%s1559 + $0x2e8] sm:$0xff]
    %v1623 = vld [vmem:[%s1559 + $0x2f0] sm:$0xff]
    %v1624 = vld [vmem:[%s1559 + $0x300] sm:$0xff]
    %v1625 = vld [vmem:[%s1559 + $0x308] sm:$0xff]
    %v1626 = vld [vmem:[%s1559 + $0x318] sm:$0xff]
    %v1627 = vld [vmem:[%s1559 + $0x320] sm:$0xff]
    %v1628 = vld [vmem:[%s1559 + $0x330] sm:$0xff]
    %v1629 = vld [vmem:[%s1559 + $0x338] sm:$0xff]
    %v1630 = vld [vmem:[%s1559 + $0x348] sm:$0xff]
    %v1631 = vld [vmem:[%s1559 + $0x350] sm:$0xff]
    %v1632 = vld [vmem:[%s1559 + $0x360] sm:$0xff]
    %v1633 = vld [vmem:[%s1559 + $0x368] sm:$0xff]
    %v1634 = vld [vmem:[%s1559 + $0x378] sm:$0xff]
    %v1635 = vld [vmem:[%s1559 + $0x380] sm:$0xff]
    %v1636 = vld [vmem:[%s1559 + $0x390] sm:$0xff]
    %v1637 = vld [vmem:[%s1559 + $0x398] sm:$0xff]
    %v1638 = vld [vmem:[%s1559 + $0x3a8] sm:$0xff]
    %v1639 = vld [vmem:[%s1559 + $0x3b0] sm:$0xff]
    %v1640 = vld [vmem:[%s1559 + $0x3c0] sm:$0xff]
    %v1641 = vld [vmem:[%s1559 + $0x3c8] sm:$0xff]
    %v1642 = vld [vmem:[%s1559 + $0x3d8] sm:$0xff]
    %v1643 = vld [vmem:[%s1559 + $0x3e0] sm:$0xff]
    %v1644 = vld [vmem:[%s1559 + $0x3f0] sm:$0xff]
    %v1645 = vld [vmem:[%s1559 + $0x3f8] sm:$0xff]
    %v1646 = vld [vmem:[%s1559 + $0x408] sm:$0xff]
    %v1647 = vld [vmem:[%s1559 + $0x410] sm:$0xff]
    %v1648 = vld [vmem:[%s1559 + $0x420] sm:$0xff]
    %v1649 = vld [vmem:[%s1559 + $0x428] sm:$0xff]
    %v1650 = vld [vmem:[%s1559 + $0x438] sm:$0xff]
    %v1651 = vld [vmem:[%s1559 + $0x440] sm:$0xff]
    %v1652 = vld [vmem:[%s1559 + $0x450] sm:$0xff]
    %v1653 = vld [vmem:[%s1559 + $0x458] sm:$0xff]
    %v1654 = vld [vmem:[%s1559 + $0x468] sm:$0xff]
    %v1655 = vld [vmem:[%s1559 + $0x470] sm:$0xff]
    %v1752 = vunpack.c.l.b16 %v1560
    %v1753 = vunpack.c.h.b16 %v1560
    %v1754 = vunpack.c.l.b16 %v1561
    %v1755 = vunpack.c.h.b16 %v1561
    %v1756 = vunpack.c.l.b16 %v1562
    %v1757 = vunpack.c.h.b16 %v1562
    %v1758 = vunpack.c.l.b16 %v1563
    %v1759 = vunpack.c.h.b16 %v1563
    %v1760 = vunpack.c.l.b16 %v1564
    %v1761 = vunpack.c.h.b16 %v1564
    %v1762 = vunpack.c.l.b16 %v1565
    %v1763 = vunpack.c.h.b16 %v1565
    %v1764 = vunpack.c.l.b16 %v1566
    %v1765 = vunpack.c.h.b16 %v1566
    %v1766 = vunpack.c.l.b16 %v1567
    %v1767 = vunpack.c.h.b16 %v1567
    %v1768 = vunpack.c.l.b16 %v1568
    %v1769 = vunpack.c.h.b16 %v1568
    %v1770 = vunpack.c.l.b16 %v1569
    %v1771 = vunpack.c.h.b16 %v1569
    %v1772 = vunpack.c.l.b16 %v1570
    %v1773 = vunpack.c.h.b16 %v1570
    %v1774 = vunpack.c.l.b16 %v1571
    %v1775 = vunpack.c.h.b16 %v1571
    %v1776 = vunpack.c.l.b16 %v1572
    %v1777 = vunpack.c.h.b16 %v1572
    %v1778 = vunpack.c.l.b16 %v1573
    %v1779 = vunpack.c.h.b16 %v1573
    %v1780 = vunpack.c.l.b16 %v1574
    %v1781 = vunpack.c.h.b16 %v1574
    %v1782 = vunpack.c.l.b16 %v1575
    %v1783 = vunpack.c.h.b16 %v1575
    %v1784 = vunpack.c.l.b16 %v1576
    %v1785 = vunpack.c.h.b16 %v1576
    %v1786 = vunpack.c.l.b16 %v1577
    %v1787 = vunpack.c.h.b16 %v1577
    %v1788 = vunpack.c.l.b16 %v1578
    %v1789 = vunpack.c.h.b16 %v1578
    %v1790 = vunpack.c.l.b16 %v1579
    %v1791 = vunpack.c.h.b16 %v1579
    %v1792 = vunpack.c.l.b16 %v1580
    %v1793 = vunpack.c.h.b16 %v1580
    %v1794 = vunpack.c.l.b16 %v1581
    %v1795 = vunpack.c.h.b16 %v1581
    %v1796 = vunpack.c.l.b16 %v1582
    %v1797 = vunpack.c.h.b16 %v1582
    %v1798 = vunpack.c.l.b16 %v1583
    %v1799 = vunpack.c.h.b16 %v1583
    %v1800 = vunpack.c.l.b16 %v1584
    %v1801 = vunpack.c.h.b16 %v1584
    %v1802 = vunpack.c.l.b16 %v1585
    %v1803 = vunpack.c.h.b16 %v1585
    %v1804 = vunpack.c.l.b16 %v1586
    %v1805 = vunpack.c.h.b16 %v1586
    %v1806 = vunpack.c.l.b16 %v1587
    %v1807 = vunpack.c.h.b16 %v1587
    %v1808 = vunpack.c.l.b16 %v1588
    %v1809 = vunpack.c.h.b16 %v1588
    %v1810 = vunpack.c.l.b16 %v1589
    %v1811 = vunpack.c.h.b16 %v1589
    %v1812 = vunpack.c.l.b16 %v1590
    %v1813 = vunpack.c.h.b16 %v1590
    %v1814 = vunpack.c.l.b16 %v1591
    %v1815 = vunpack.c.h.b16 %v1591
    %v1816 = vunpack.c.l.b16 %v1592
    %v1817 = vunpack.c.h.b16 %v1592
    %v1818 = vunpack.c.l.b16 %v1593
    %v1819 = vunpack.c.h.b16 %v1593
    %v1820 = vunpack.c.l.b16 %v1594
    %v1821 = vunpack.c.h.b16 %v1594
    %v1822 = vunpack.c.l.b16 %v1595
    %v1823 = vunpack.c.h.b16 %v1595
    %v1824 = vunpack.c.l.b16 %v1596
    %v1825 = vunpack.c.h.b16 %v1596
    %v1826 = vunpack.c.l.b16 %v1597
    %v1827 = vunpack.c.h.b16 %v1597
    %v1828 = vunpack.c.l.b16 %v1598
    %v1829 = vunpack.c.h.b16 %v1598
    %v1830 = vunpack.c.l.b16 %v1599
    %v1831 = vunpack.c.h.b16 %v1599
    %v1832 = vunpack.c.l.b16 %v1600
    %v1833 = vunpack.c.h.b16 %v1600
    %v1834 = vunpack.c.l.b16 %v1601
    %v1835 = vunpack.c.h.b16 %v1601
    %v1836 = vunpack.c.l.b16 %v1602
    %v1837 = vunpack.c.h.b16 %v1602
    %v1838 = vunpack.c.l.b16 %v1603
    %v1839 = vunpack.c.h.b16 %v1603
    %v1840 = vunpack.c.l.b16 %v1604
    %v1841 = vunpack.c.h.b16 %v1604
    %v1842 = vunpack.c.l.b16 %v1605
    %v1843 = vunpack.c.h.b16 %v1605
    %v1844 = vunpack.c.l.b16 %v1606
    %v1845 = vunpack.c.h.b16 %v1606
    %v1846 = vunpack.c.l.b16 %v1607
    %v1847 = vunpack.c.h.b16 %v1607
    %v1848 = vunpack.c.l.b16 %v1608
    %v1849 = vunpack.c.h.b16 %v1608
    %v1850 = vunpack.c.l.b16 %v1609
    %v1851 = vunpack.c.h.b16 %v1609
    %v1852 = vunpack.c.l.b16 %v1610
    %v1853 = vunpack.c.h.b16 %v1610
    %v1854 = vunpack.c.l.b16 %v1611
    %v1855 = vunpack.c.h.b16 %v1611
    %v1856 = vunpack.c.l.b16 %v1612
    %v1857 = vunpack.c.h.b16 %v1612
    %v1858 = vunpack.c.l.b16 %v1613
    %v1859 = vunpack.c.h.b16 %v1613
    %v1860 = vunpack.c.l.b16 %v1614
    %v1861 = vunpack.c.h.b16 %v1614
    %v1862 = vunpack.c.l.b16 %v1615
    %v1863 = vunpack.c.h.b16 %v1615
    %v1864 = vunpack.c.l.b16 %v1616
    %v1865 = vunpack.c.h.b16 %v1616
    %v1866 = vunpack.c.l.b16 %v1617
    %v1867 = vunpack.c.h.b16 %v1617
    %v1868 = vunpack.c.l.b16 %v1618
    %v1869 = vunpack.c.h.b16 %v1618
    %v1870 = vunpack.c.l.b16 %v1619
    %v1871 = vunpack.c.h.b16 %v1619
    %v1872 = vunpack.c.l.b16 %v1620
    %v1873 = vunpack.c.h.b16 %v1620
    %v1874 = vunpack.c.l.b16 %v1621
    %v1875 = vunpack.c.h.b16 %v1621
    %v1876 = vunpack.c.l.b16 %v1622
    %v1877 = vunpack.c.h.b16 %v1622
    %v1878 = vunpack.c.l.b16 %v1623
    %v1879 = vunpack.c.h.b16 %v1623
    %v1880 = vunpack.c.l.b16 %v1624
    %v1881 = vunpack.c.h.b16 %v1624
    %v1882 = vunpack.c.l.b16 %v1625
    %v1883 = vunpack.c.h.b16 %v1625
    %v1884 = vunpack.c.l.b16 %v1626
    %v1885 = vunpack.c.h.b16 %v1626
    %v1886 = vunpack.c.l.b16 %v1627
    %v1887 = vunpack.c.h.b16 %v1627
    %v1888 = vunpack.c.l.b16 %v1628
    %v1889 = vunpack.c.h.b16 %v1628
    %v1890 = vunpack.c.l.b16 %v1629
    %v1891 = vunpack.c.h.b16 %v1629
    %v1892 = vunpack.c.l.b16 %v1630
    %v1893 = vunpack.c.h.b16 %v1630
    %v1894 = vunpack.c.l.b16 %v1631
    %v1895 = vunpack.c.h.b16 %v1631
    %v1896 = vunpack.c.l.b16 %v1632
    %v1897 = vunpack.c.h.b16 %v1632
    %v1898 = vunpack.c.l.b16 %v1633
    %v1899 = vunpack.c.h.b16 %v1633
    %v1900 = vunpack.c.l.b16 %v1634
    %v1901 = vunpack.c.h.b16 %v1634
    %v1902 = vunpack.c.l.b16 %v1635
    %v1903 = vunpack.c.h.b16 %v1635
    %v1904 = vunpack.c.l.b16 %v1636
    %v1905 = vunpack.c.h.b16 %v1636
    %v1906 = vunpack.c.l.b16 %v1637
    %v1907 = vunpack.c.h.b16 %v1637
    %v1908 = vunpack.c.l.b16 %v1638
    %v1909 = vunpack.c.h.b16 %v1638
    %v1910 = vunpack.c.l.b16 %v1639
    %v1911 = vunpack.c.h.b16 %v1639
    %v1912 = vunpack.c.l.b16 %v1640
    %v1913 = vunpack.c.h.b16 %v1640
    %v1914 = vunpack.c.l.b16 %v1641
    %v1915 = vunpack.c.h.b16 %v1641
    %v1916 = vunpack.c.l.b16 %v1642
    %v1917 = vunpack.c.h.b16 %v1642
    %v1918 = vunpack.c.l.b16 %v1643
    %v1919 = vunpack.c.h.b16 %v1643
    %v1920 = vunpack.c.l.b16 %v1644
    %v1921 = vunpack.c.h.b16 %v1644
    %v1922 = vunpack.c.l.b16 %v1645
    %v1923 = vunpack.c.h.b16 %v1645
    %v1924 = vunpack.c.l.b16 %v1646
    %v1925 = vunpack.c.h.b16 %v1646
    %v1926 = vunpack.c.l.b16 %v1647
    %v1927 = vunpack.c.h.b16 %v1647
    %v1928 = vunpack.c.l.b16 %v1648
    %v1929 = vunpack.c.h.b16 %v1648
    %v1930 = vunpack.c.l.b16 %v1649
    %v1931 = vunpack.c.h.b16 %v1649
    %v1932 = vunpack.c.l.b16 %v1650
    %v1933 = vunpack.c.h.b16 %v1650
    %v1934 = vunpack.c.l.b16 %v1651
    %v1935 = vunpack.c.h.b16 %v1651
    %v1936 = vunpack.c.l.b16 %v1652
    %v1937 = vunpack.c.h.b16 %v1652
    %v1938 = vunpack.c.l.b16 %v1653
    %v1939 = vunpack.c.h.b16 %v1653
    %v1940 = vunpack.c.l.b16 %v1654
    %v1941 = vunpack.c.h.b16 %v1654
    %v1942 = vunpack.c.l.b16 %v1655
    %v1943 = vunpack.c.h.b16 %v1655
    %v1944 = vpack.c.b16 %v1756, %v1752
    %v1945 = vpack.c.b16 %v1757, %v1753
    %v1946 = vpack.c.b16 %v1758, %v1754
    %v1947 = vpack.c.b16 %v1759, %v1755
    %v1948 = vpack.c.b16 %v1764, %v1760
    %v1949 = vpack.c.b16 %v1765, %v1761
    %v1950 = vpack.c.b16 %v1766, %v1762
    %v1951 = vpack.c.b16 %v1767, %v1763
    %v1952 = vpack.c.b16 %v1772, %v1768
    %v1953 = vpack.c.b16 %v1773, %v1769
    %v1954 = vpack.c.b16 %v1774, %v1770
    %v1955 = vpack.c.b16 %v1775, %v1771
    %v1956 = vpack.c.b16 %v1780, %v1776
    %v1957 = vpack.c.b16 %v1781, %v1777
    %v1958 = vpack.c.b16 %v1782, %v1778
    %v1959 = vpack.c.b16 %v1783, %v1779
    %v1960 = vpack.c.b16 %v1788, %v1784
    %v1961 = vpack.c.b16 %v1789, %v1785
    %v1962 = vpack.c.b16 %v1790, %v1786
    %v1963 = vpack.c.b16 %v1791, %v1787
    %v1964 = vpack.c.b16 %v1796, %v1792
    %v1965 = vpack.c.b16 %v1797, %v1793
    %v1966 = vpack.c.b16 %v1798, %v1794
    %v1967 = vpack.c.b16 %v1799, %v1795
    %v1968 = vpack.c.b16 %v1804, %v1800
    %v1969 = vpack.c.b16 %v1805, %v1801
    %v1970 = vpack.c.b16 %v1806, %v1802
    %v1971 = vpack.c.b16 %v1807, %v1803
    %v1972 = vpack.c.b16 %v1812, %v1808
    %v1973 = vpack.c.b16 %v1813, %v1809
    %v1974 = vpack.c.b16 %v1814, %v1810
    %v1975 = vpack.c.b16 %v1815, %v1811
    %v1976 = vpack.c.b16 %v1820, %v1816
    %v1977 = vpack.c.b16 %v1821, %v1817
    %v1978 = vpack.c.b16 %v1822, %v1818
    %v1979 = vpack.c.b16 %v1823, %v1819
    %v1980 = vpack.c.b16 %v1828, %v1824
    %v1981 = vpack.c.b16 %v1829, %v1825
    %v1982 = vpack.c.b16 %v1830, %v1826
    %v1983 = vpack.c.b16 %v1831, %v1827
    %v1984 = vpack.c.b16 %v1836, %v1832
    %v1985 = vpack.c.b16 %v1837, %v1833
    %v1986 = vpack.c.b16 %v1838, %v1834
    %v1987 = vpack.c.b16 %v1839, %v1835
    %v1988 = vpack.c.b16 %v1844, %v1840
    %v1989 = vpack.c.b16 %v1845, %v1841
    %v1990 = vpack.c.b16 %v1846, %v1842
    %v1991 = vpack.c.b16 %v1847, %v1843
    %v1992 = vpack.c.b16 %v1852, %v1848
    %v1993 = vpack.c.b16 %v1853, %v1849
    %v1994 = vpack.c.b16 %v1854, %v1850
    %v1995 = vpack.c.b16 %v1855, %v1851
    %v1996 = vpack.c.b16 %v1860, %v1856
    %v1997 = vpack.c.b16 %v1861, %v1857
    %v1998 = vpack.c.b16 %v1862, %v1858
    %v1999 = vpack.c.b16 %v1863, %v1859
    %v2000 = vpack.c.b16 %v1868, %v1864
    %v2001 = vpack.c.b16 %v1869, %v1865
    %v2002 = vpack.c.b16 %v1870, %v1866
    %v2003 = vpack.c.b16 %v1871, %v1867
    %v2004 = vpack.c.b16 %v1876, %v1872
    %v2005 = vpack.c.b16 %v1877, %v1873
    %v2006 = vpack.c.b16 %v1878, %v1874
    %v2007 = vpack.c.b16 %v1879, %v1875
    %v2008 = vpack.c.b16 %v1884, %v1880
    %v2009 = vpack.c.b16 %v1885, %v1881
    %v2010 = vpack.c.b16 %v1886, %v1882
    %v2011 = vpack.c.b16 %v1887, %v1883
    %v2012 = vpack.c.b16 %v1892, %v1888
    %v2013 = vpack.c.b16 %v1893, %v1889
    %v2014 = vpack.c.b16 %v1894, %v1890
    %v2015 = vpack.c.b16 %v1895, %v1891
    %v2016 = vpack.c.b16 %v1900, %v1896
    %v2017 = vpack.c.b16 %v1901, %v1897
    %v2018 = vpack.c.b16 %v1902, %v1898
    %v2019 = vpack.c.b16 %v1903, %v1899
    %v2020 = vpack.c.b16 %v1908, %v1904
    %v2021 = vpack.c.b16 %v1909, %v1905
    %v2022 = vpack.c.b16 %v1910, %v1906
    %v2023 = vpack.c.b16 %v1911, %v1907
    %v2024 = vpack.c.b16 %v1916, %v1912
    %v2025 = vpack.c.b16 %v1917, %v1913
    %v2026 = vpack.c.b16 %v1918, %v1914
    %v2027 = vpack.c.b16 %v1919, %v1915
    %v2028 = vpack.c.b16 %v1924, %v1920
    %v2029 = vpack.c.b16 %v1925, %v1921
    %v2030 = vpack.c.b16 %v1926, %v1922
    %v2031 = vpack.c.b16 %v1927, %v1923
    %v2032 = vpack.c.b16 %v1932, %v1928
    %v2033 = vpack.c.b16 %v1933, %v1929
    %v2034 = vpack.c.b16 %v1934, %v1930
    %v2035 = vpack.c.b16 %v1935, %v1931
    %v2036 = vpack.c.b16 %v1940, %v1936
    %v2037 = vpack.c.b16 %v1941, %v1937
    %v2038 = vpack.c.b16 %v1942, %v1938
    %v2039 = vpack.c.b16 %v1943, %v1939
    %2136 = vmatprep.subr.bf16.mxu0 %v1945
    %2137 = vmatpush1.bf16.msra.mxu0 %v1944
    %2138 = vmatprep.subr.bf16.mxu0 %v1949
    %2139 = vmatpush1.bf16.msra.mxu0 %v1948
    %2140 = vmatprep.subr.bf16.mxu0 %v1953
    %2141 = vmatpush1.bf16.msra.mxu0 %v1952
    %2142 = vmatprep.subr.bf16.mxu0 %v1957
    %2143 = vmatpush1.bf16.msra.mxu0 %v1956
    %2144 = vmatprep.subr.bf16.mxu0 %v1961
    %2145 = vmatpush1.bf16.msra.mxu0 %v1960
    %2146 = vmatprep.subr.bf16.mxu0 %v1965
    %2147 = vmatpush1.bf16.msra.mxu0 %v1964
    %2148 = vmatprep.subr.bf16.mxu0 %v1969
    %2149 = vmatpush1.bf16.msra.mxu0 %v1968
    %2150 = vmatprep.subr.bf16.mxu0 %v1973
    %2151 = vmatpush1.bf16.msra.mxu0 %v1972
    %2152 = vmatprep.subr.bf16.mxu0 %v1977
    %2153 = vmatpush1.bf16.msra.mxu0 %v1976
    %2154 = vmatprep.subr.bf16.mxu0 %v1981
    %2155 = vmatpush1.bf16.msra.mxu0 %v1980
    %2156 = vmatprep.subr.bf16.mxu0 %v1985
    %2157 = vmatpush1.bf16.msra.mxu0 %v1984
    %2158 = vmatprep.subr.bf16.mxu0 %v1989
    %2159 = vmatpush1.bf16.msra.mxu0 %v1988
    %2160 = vmatprep.subr.bf16.mxu0 %v1993
    %2161 = vmatpush1.bf16.msra.mxu0 %v1992
    %2162 = vmatprep.subr.bf16.mxu0 %v1997
    %2163 = vmatpush1.bf16.msra.mxu0 %v1996
    %2164 = vmatprep.subr.bf16.mxu0 %v2001
    %2165 = vmatpush1.bf16.msra.mxu0 %v2000
    %2166 = vmatprep.subr.bf16.mxu0 %v2005
    %2167 = vmatpush1.bf16.msra.mxu0 %v2004
    %2168 = vmatprep.mubr.bf16.mxu0 %v1557
    %2169 = vmatmul.mubr.bf16.gmra.mrb[0].mxu0 %v1556
    %v2170 = vpop.f32.mrb[0].mxu0
    %v2171 = vadd.f32 0.0, %v2170
    %v2172 = vpop.f32.mrb[0].mxu0
    %v2173 = vadd.f32 0.0, %v2172
    %v2174 = vpop.f32.mrb[0].mxu0
    %v2175 = vpop.f32.mrb[0].mxu0
    %2176 = vdwg.mxu0
    %2177 = vmatprep.subr.bf16.mxu0 %v2009
    %2178 = vmatpush1.bf16.msra.mxu0 %v2008
    %2179 = vmatprep.subr.bf16.mxu0 %v2013
    %2180 = vmatpush1.bf16.msra.mxu0 %v2012
    %2181 = vmatprep.subr.bf16.mxu0 %v2017
    %2182 = vmatpush1.bf16.msra.mxu0 %v2016
    %2183 = vmatprep.subr.bf16.mxu0 %v2021
    %2184 = vmatpush1.bf16.msra.mxu0 %v2020
    %2185 = vmatprep.subr.bf16.mxu0 %v2025
    %2186 = vmatpush1.bf16.msra.mxu0 %v2024
    %2187 = vmatprep.subr.bf16.mxu0 %v2029
    %2188 = vmatpush1.bf16.msra.mxu0 %v2028
    %2189 = vmatprep.subr.bf16.mxu0 %v2033
    %2190 = vmatpush1.bf16.msra.mxu0 %v2032
    %2191 = vmatprep.subr.bf16.mxu0 %v2037
    %2192 = vmatpush1.bf16.msra.mxu0 %v2036
    %2193 = vmatprep.subr.bf16.mxu0 0
    %2194 = vmatpush1.bf16.msra.mxu0 0
    %2195 = vmatprep.subr.bf16.mxu0 0
    %2196 = vmatpush1.bf16.msra.mxu0 0
    %2197 = vmatprep.subr.bf16.mxu0 0
    %2198 = vmatpush1.bf16.msra.mxu0 0
    %2199 = vmatprep.subr.bf16.mxu0 0
    %2200 = vmatpush1.bf16.msra.mxu0 0
    %2201 = vmatprep.subr.bf16.mxu0 0
    %2202 = vmatpush1.bf16.msra.mxu0 0
    %2203 = vmatprep.subr.bf16.mxu0 0
    %2204 = vmatpush1.bf16.msra.mxu0 0
    %2205 = vmatprep.subr.bf16.mxu0 0
    %2206 = vmatpush1.bf16.msra.mxu0 0
    %2207 = vmatprep.subr.bf16.mxu0 0
    %2208 = vmatpush1.bf16.msra.mxu0 0
    %2209 = vmatprep.mubr.bf16.mxu0 0
    %2210 = vmatmul.mubr.bf16.gmra.mrb[0].mxu0 %v1558
    %v2211 = vpop.f32.mrb[0].mxu0
    %v2212 = vadd.f32 %v2171, %v2211
    %v2213 = vpop.f32.mrb[0].mxu0
    %v2214 = vadd.f32 %v2173, %v2213
    %v2215 = vpop.f32.mrb[0].mxu0
    %v2216 = vpop.f32.mrb[0].mxu0
    %2217 = vdwg.mxu0
    %2218 = vmatprep.subr.bf16.mxu0 %v1947
    %2219 = vmatpush1.bf16.msra.mxu0 %v1946
    %2220 = vmatprep.subr.bf16.mxu0 %v1951
    %2221 = vmatpush1.bf16.msra.mxu0 %v1950
    %2222 = vmatprep.subr.bf16.mxu0 %v1955
    %2223 = vmatpush1.bf16.msra.mxu0 %v1954
    %2224 = vmatprep.subr.bf16.mxu0 %v1959
    %2225 = vmatpush1.bf16.msra.mxu0 %v1958
    %2226 = vmatprep.subr.bf16.mxu0 %v1963
    %2227 = vmatpush1.bf16.msra.mxu0 %v1962
    %2228 = vmatprep.subr.bf16.mxu0 %v1967
    %2229 = vmatpush1.bf16.msra.mxu0 %v1966
    %2230 = vmatprep.subr.bf16.mxu0 %v1971
    %2231 = vmatpush1.bf16.msra.mxu0 %v1970
    %2232 = vmatprep.subr.bf16.mxu0 %v1975
    %2233 = vmatpush1.bf16.msra.mxu0 %v1974
    %2234 = vmatprep.subr.bf16.mxu0 %v1979
    %2235 = vmatpush1.bf16.msra.mxu0 %v1978
    %2236 = vmatprep.subr.bf16.mxu0 %v1983
    %2237 = vmatpush1.bf16.msra.mxu0 %v1982
    %2238 = vmatprep.subr.bf16.mxu0 %v1987
    %2239 = vmatpush1.bf16.msra.mxu0 %v1986
    %2240 = vmatprep.subr.bf16.mxu0 %v1991
    %2241 = vmatpush1.bf16.msra.mxu0 %v1990
    %2242 = vmatprep.subr.bf16.mxu0 %v1995
    %2243 = vmatpush1.bf16.msra.mxu0 %v1994
    %2244 = vmatprep.subr.bf16.mxu0 %v1999
    %2245 = vmatpush1.bf16.msra.mxu0 %v1998
    %2246 = vmatprep.subr.bf16.mxu0 %v2003
    %2247 = vmatpush1.bf16.msra.mxu0 %v2002
    %2248 = vmatprep.subr.bf16.mxu0 %v2007
    %2249 = vmatpush1.bf16.msra.mxu0 %v2006
    %2250 = vmatprep.mubr.bf16.mxu0 %v1557
    %2251 = vmatmul.mubr.bf16.gmra.mrb[0].mxu0 %v1556
    %v2252 = vpop.f32.mrb[0].mxu0
    %v2253 = vadd.f32 0.0, %v2252
    %v2254 = vpop.f32.mrb[0].mxu0
    %v2255 = vadd.f32 0.0, %v2254
    %v2256 = vpop.f32.mrb[0].mxu0
    %v2257 = vpop.f32.mrb[0].mxu0
    %2258 = vdwg.mxu0
    %2259 = vmatprep.subr.bf16.mxu0 %v2011
    %2260 = vmatpush1.bf16.msra.mxu0 %v2010
    %2261 = vmatprep.subr.bf16.mxu0 %v2015
    %2262 = vmatpush1.bf16.msra.mxu0 %v2014
    %2263 = vmatprep.subr.bf16.mxu0 %v2019
    %2264 = vmatpush1.bf16.msra.mxu0 %v2018
    %2265 = vmatprep.subr.bf16.mxu0 %v2023
    %2266 = vmatpush1.bf16.msra.mxu0 %v2022
    %2267 = vmatprep.subr.bf16.mxu0 %v2027
    %2268 = vmatpush1.bf16.msra.mxu0 %v2026
    %2269 = vmatprep.subr.bf16.mxu0 %v2031
    %2270 = vmatpush1.bf16.msra.mxu0 %v2030
    %2271 = vmatprep.subr.bf16.mxu0 %v2035
    %2272 = vmatpush1.bf16.msra.mxu0 %v2034
    %2273 = vmatprep.subr.bf16.mxu0 %v2039
    %2274 = vmatpush1.bf16.msra.mxu0 %v2038
    %2275 = vmatprep.subr.bf16.mxu0 0
    %2276 = vmatpush1.bf16.msra.mxu0 0
    %2277 = vmatprep.subr.bf16.mxu0 0
    %2278 = vmatpush1.bf16.msra.mxu0 0
    %2279 = vmatprep.subr.bf16.mxu0 0
    %2280 = vmatpush1.bf16.msra.mxu0 0
    %2281 = vmatprep.subr.bf16.mxu0 0
    %2282 = vmatpush1.bf16.msra.mxu0 0
    %2283 = vmatprep.subr.bf16.mxu0 0
    %2284 = vmatpush1.bf16.msra.mxu0 0
    %2285 = vmatprep.subr.bf16.mxu0 0
    %2286 = vmatpush1.bf16.msra.mxu0 0
    %2287 = vmatprep.subr.bf16.mxu0 0
    %2288 = vmatpush1.bf16.msra.mxu0 0
    %2289 = vmatprep.subr.bf16.mxu0 0
    %2290 = vmatpush1.bf16.msra.mxu0 0
    %2291 = vmatprep.mubr.bf16.mxu0 0
    %2292 = vmatmul.mubr.bf16.gmra.mrb[0].mxu0 %v1558
    %v2293 = vpop.f32.mrb[0].mxu0
    %v2294 = vadd.f32 %v2253, %v2293
    %v2295 = vpop.f32.mrb[0].mxu0
    %v2296 = vadd.f32 %v2255, %v2295
    %v2297 = vpop.f32.mrb[0].mxu0
    %v2298 = vpop.f32.mrb[0].mxu0
    %2299 = vdwg.mxu0
    %s2300 = scalar_lea.vmem [#allocation10], 3
    %v2301 = vld [vmem:[%s2300] sm:$0x7]
    %v2303 = vlaneseq
    %v2304 = vshrl.u32 %v2303, 7
    %v2305 = vsub.s32 0, %v2304
    %v2306 = vrot.slane %v2301, %v2305
    %v2307 = vlaneseq
    %v2308 = vshrl.u32 %v2307, 7
    %v2309 = vsub.s32 1, %v2308
    %v2310 = vrot.slane %v2301, %v2309
    %v2311 = vlaneseq
    %v2312 = vshrl.u32 %v2311, 7
    %v2313 = vsub.s32 2, %v2312
    %v2314 = vrot.slane %v2301, %v2313
    %v2318 = vadd.f32 %v2212, %v2306
    %v2319 = vadd.f32 %v2214, %v2310
    %v2320 = vadd.f32 %v2294, %v2314
    %v2321 = vmax.f32 %v2318, 0.0
    %v2322 = vmax.f32 %v2319, 0.0
    %v2323 = vmax.f32 %v2320, 0.0
    %v2324 = vadd.f32 %v2296, %v406
    %v2325 = vpack.c.bf16 %v1547, %v1547
    %v2326 = vpack.c.bf16 %v1548, %v1548
    %v2327 = vpack.c.bf16 %v1549, %v1549
    %v2328 = vpack.c.bf16 %v2321, %v2321
    %v2329 = vpack.c.bf16 %v2322, %v2322
    %v2330 = vpack.c.bf16 %v2323, %v2323
    %v2331 = vld [vmem:[#allocation11] sm:$0xf]
    %v2332 = vld [vmem:[#allocation11 + $0x4] sm:$0xf]
    %v2333 = vld [vmem:[#allocation11 + $0x8] sm:$0xf]
    %v2334 = vld [vmem:[#allocation11 + $0xc] sm:$0xf]
    %v2335 = vld [vmem:[#allocation11 + $0x10] sm:$0xf]
    %v2336 = vld [vmem:[#allocation11 + $0x14] sm:$0xf]
    %v2337 = vld [vmem:[#allocation11 + $0x18] sm:$0xf]
    %v2338 = vld [vmem:[#allocation11 + $0x1c] sm:$0xf]
    %v2339 = vld [vmem:[#allocation11 + $0x20] sm:$0xf]
    %v2340 = vld [vmem:[#allocation11 + $0x24] sm:$0xf]
    %v2341 = vld [vmem:[#allocation11 + $0x28] sm:$0xf]
    %v2342 = vld [vmem:[#allocation11 + $0x2c] sm:$0xf]
    %v2343 = vld [vmem:[#allocation11 + $0x30] sm:$0xf]
    %v2344 = vld [vmem:[#allocation11 + $0x34] sm:$0xf]
    %v2345 = vld [vmem:[#allocation11 + $0x38] sm:$0xf]
    %v2346 = vld [vmem:[#allocation11 + $0x3c] sm:$0xf]
    %v2347 = vld [vmem:[#allocation11 + $0x40] sm:$0xf]
    %v2348 = vld [vmem:[#allocation11 + $0x44] sm:$0xf]
    %v2349 = vld [vmem:[#allocation11 + $0x48] sm:$0xf]
    %v2350 = vld [vmem:[#allocation11 + $0x4c] sm:$0xf]
    %v2351 = vld [vmem:[#allocation11 + $0x50] sm:$0xf]
    %v2352 = vld [vmem:[#allocation11 + $0x54] sm:$0xf]
    %v2353 = vld [vmem:[#allocation11 + $0x58] sm:$0xf]
    %v2354 = vld [vmem:[#allocation11 + $0x5c] sm:$0xf]
    %v2355 = vld [vmem:[#allocation11 + $0x60] sm:$0xf]
    %v2356 = vld [vmem:[#allocation11 + $0x64] sm:$0xf]
    %v2357 = vld [vmem:[#allocation11 + $0x68] sm:$0xf]
    %v2358 = vld [vmem:[#allocation11 + $0x6c] sm:$0xf]
    %v2359 = vld [vmem:[#allocation11 + $0x70] sm:$0xf]
    %v2360 = vld [vmem:[#allocation11 + $0x74] sm:$0xf]
    %v2361 = vld [vmem:[#allocation11 + $0x78] sm:$0xf]
    %v2362 = vld [vmem:[#allocation11 + $0x7c] sm:$0xf]
    %v2363 = vld [vmem:[#allocation11 + $0x80] sm:$0xf]
    %v2364 = vld [vmem:[#allocation11 + $0x84] sm:$0xf]
    %v2365 = vld [vmem:[#allocation11 + $0x88] sm:$0xf]
    %v2366 = vld [vmem:[#allocation11 + $0x8c] sm:$0xf]
    %v2367 = vld [vmem:[#allocation11 + $0x90] sm:$0xf]
    %v2368 = vld [vmem:[#allocation11 + $0x94] sm:$0xf]
    %v2369 = vld [vmem:[#allocation11 + $0x98] sm:$0xf]
    %v2370 = vld [vmem:[#allocation11 + $0x9c] sm:$0xf]
    %v2371 = vld [vmem:[#allocation11 + $0xa0] sm:$0xf]
    %v2372 = vld [vmem:[#allocation11 + $0xa4] sm:$0xf]
    %v2373 = vld [vmem:[#allocation11 + $0xa8] sm:$0xf]
    %v2374 = vld [vmem:[#allocation11 + $0xac] sm:$0xf]
    %v2375 = vld [vmem:[#allocation11 + $0xb0] sm:$0xf]
    %v2376 = vld [vmem:[#allocation11 + $0xb4] sm:$0xf]
    %v2377 = vld [vmem:[#allocation11 + $0xb8] sm:$0xf]
    %v2378 = vld [vmem:[#allocation11 + $0xbc] sm:$0xf]
    %v2379 = vld [vmem:[#allocation11 + $0xc0] sm:$0xf]
    %v2380 = vld [vmem:[#allocation11 + $0xc4] sm:$0xf]
    %v2381 = vld [vmem:[#allocation11 + $0xc8] sm:$0xf]
    %v2382 = vld [vmem:[#allocation11 + $0xcc] sm:$0xf]
    %v2383 = vld [vmem:[#allocation11 + $0xd0] sm:$0xf]
    %v2384 = vld [vmem:[#allocation11 + $0xd4] sm:$0xf]
    %v2385 = vld [vmem:[#allocation11 + $0xd8] sm:$0xf]
    %v2386 = vld [vmem:[#allocation11 + $0xdc] sm:$0xf]
    %v2387 = vld [vmem:[#allocation11 + $0xe0] sm:$0xf]
    %v2388 = vld [vmem:[#allocation11 + $0xe4] sm:$0xf]
    %v2389 = vld [vmem:[#allocation11 + $0xe8] sm:$0xf]
    %v2390 = vld [vmem:[#allocation11 + $0xec] sm:$0xf]
    %v2391 = vld [vmem:[#allocation11 + $0xf0] sm:$0xf]
    %v2392 = vld [vmem:[#allocation11 + $0xf4] sm:$0xf]
    %v2393 = vld [vmem:[#allocation11 + $0xf8] sm:$0xf]
    %v2394 = vld [vmem:[#allocation11 + $0xfc] sm:$0xf]
    %v2395 = vld [vmem:[#allocation11 + $0x100] sm:$0xf]
    %v2396 = vld [vmem:[#allocation11 + $0x104] sm:$0xf]
    %v2397 = vld [vmem:[#allocation11 + $0x108] sm:$0xf]
    %v2398 = vld [vmem:[#allocation11 + $0x10c] sm:$0xf]
    %v2399 = vld [vmem:[#allocation11 + $0x110] sm:$0xf]
    %v2400 = vld [vmem:[#allocation11 + $0x114] sm:$0xf]
    %v2401 = vld [vmem:[#allocation11 + $0x118] sm:$0xf]
    %v2402 = vld [vmem:[#allocation11 + $0x11c] sm:$0xf]
    %v2403 = vld [vmem:[#allocation11 + $0x120] sm:$0xf]
    %v2404 = vld [vmem:[#allocation11 + $0x124] sm:$0xf]
    %v2405 = vld [vmem:[#allocation11 + $0x128] sm:$0xf]
    %v2406 = vld [vmem:[#allocation11 + $0x12c] sm:$0xf]
    %v2407 = vld [vmem:[#allocation11 + $0x130] sm:$0xf]
    %v2408 = vld [vmem:[#allocation11 + $0x134] sm:$0xf]
    %v2409 = vld [vmem:[#allocation11 + $0x138] sm:$0xf]
    %v2410 = vld [vmem:[#allocation11 + $0x13c] sm:$0xf]
    %v2411 = vld [vmem:[#allocation11 + $0x140] sm:$0xf]
    %v2412 = vld [vmem:[#allocation11 + $0x144] sm:$0xf]
    %v2413 = vld [vmem:[#allocation11 + $0x148] sm:$0xf]
    %v2414 = vld [vmem:[#allocation11 + $0x14c] sm:$0xf]
    %v2415 = vld [vmem:[#allocation11 + $0x150] sm:$0xf]
    %v2416 = vld [vmem:[#allocation11 + $0x154] sm:$0xf]
    %v2417 = vld [vmem:[#allocation11 + $0x158] sm:$0xf]
    %v2418 = vld [vmem:[#allocation11 + $0x15c] sm:$0xf]
    %v2419 = vld [vmem:[#allocation11 + $0x160] sm:$0xf]
    %v2420 = vld [vmem:[#allocation11 + $0x164] sm:$0xf]
    %v2421 = vld [vmem:[#allocation11 + $0x168] sm:$0xf]
    %v2422 = vld [vmem:[#allocation11 + $0x16c] sm:$0xf]
    %v2423 = vld [vmem:[#allocation11 + $0x170] sm:$0xf]
    %v2424 = vld [vmem:[#allocation11 + $0x174] sm:$0xf]
    %v2425 = vld [vmem:[#allocation11 + $0x178] sm:$0xf]
    %v2426 = vld [vmem:[#allocation11 + $0x17c] sm:$0xf]
    %v2427 = vld [vmem:[#allocation13] sm:$0x1]
    %v2429 = vlaneseq
    %v2430 = vshrl.u32 %v2429, 7
    %v2431 = vsub.s32 0, %v2430
    %v2432 = vrot.slane %v2427, %v2431
    %v2530 = vunpack.c.l.b16 %v2331
    %v2531 = vunpack.c.l.b16 %v2332
    %v2532 = vunpack.c.l.b16 %v2333
    %v2533 = vunpack.c.l.b16 %v2334
    %v2534 = vunpack.c.l.b16 %v2335
    %v2535 = vunpack.c.l.b16 %v2336
    %v2536 = vunpack.c.l.b16 %v2337
    %v2537 = vunpack.c.l.b16 %v2338
    %v2538 = vunpack.c.l.b16 %v2339
    %v2539 = vunpack.c.l.b16 %v2340
    %v2540 = vunpack.c.l.b16 %v2341
    %v2541 = vunpack.c.l.b16 %v2342
    %v2542 = vunpack.c.l.b16 %v2343
    %v2543 = vunpack.c.l.b16 %v2344
    %v2544 = vunpack.c.l.b16 %v2345
    %v2545 = vunpack.c.l.b16 %v2346
    %v2546 = vunpack.c.l.b16 %v2347
    %v2547 = vunpack.c.l.b16 %v2348
    %v2548 = vunpack.c.l.b16 %v2349
    %v2549 = vunpack.c.l.b16 %v2350
    %v2550 = vunpack.c.l.b16 %v2351
    %v2551 = vunpack.c.l.b16 %v2352
    %v2552 = vunpack.c.l.b16 %v2353
    %v2553 = vunpack.c.l.b16 %v2354
    %v2554 = vunpack.c.l.b16 %v2355
    %v2555 = vunpack.c.l.b16 %v2356
    %v2556 = vunpack.c.l.b16 %v2357
    %v2557 = vunpack.c.l.b16 %v2358
    %v2558 = vunpack.c.l.b16 %v2359
    %v2559 = vunpack.c.l.b16 %v2360
    %v2560 = vunpack.c.l.b16 %v2361
    %v2561 = vunpack.c.l.b16 %v2362
    %v2562 = vunpack.c.l.b16 %v2363
    %v2563 = vunpack.c.l.b16 %v2364
    %v2564 = vunpack.c.l.b16 %v2365
    %v2565 = vunpack.c.l.b16 %v2366
    %v2566 = vunpack.c.l.b16 %v2367
    %v2567 = vunpack.c.l.b16 %v2368
    %v2568 = vunpack.c.l.b16 %v2369
    %v2569 = vunpack.c.l.b16 %v2370
    %v2570 = vunpack.c.l.b16 %v2371
    %v2571 = vunpack.c.l.b16 %v2372
    %v2572 = vunpack.c.l.b16 %v2373
    %v2573 = vunpack.c.l.b16 %v2374
    %v2574 = vunpack.c.l.b16 %v2375
    %v2575 = vunpack.c.l.b16 %v2376
    %v2576 = vunpack.c.l.b16 %v2377
    %v2577 = vunpack.c.l.b16 %v2378
    %v2578 = vunpack.c.l.b16 %v2379
    %v2579 = vunpack.c.l.b16 %v2380
    %v2580 = vunpack.c.l.b16 %v2381
    %v2581 = vunpack.c.l.b16 %v2382
    %v2582 = vunpack.c.l.b16 %v2383
    %v2583 = vunpack.c.l.b16 %v2384
    %v2584 = vunpack.c.l.b16 %v2385
    %v2585 = vunpack.c.l.b16 %v2386
    %v2586 = vunpack.c.l.b16 %v2387
    %v2587 = vunpack.c.l.b16 %v2388
    %v2588 = vunpack.c.l.b16 %v2389
    %v2589 = vunpack.c.l.b16 %v2390
    %v2590 = vunpack.c.l.b16 %v2391
    %v2591 = vunpack.c.l.b16 %v2392
    %v2592 = vunpack.c.l.b16 %v2393
    %v2593 = vunpack.c.l.b16 %v2394
    %v2594 = vunpack.c.l.b16 %v2395
    %v2595 = vunpack.c.l.b16 %v2396
    %v2596 = vunpack.c.l.b16 %v2397
    %v2597 = vunpack.c.l.b16 %v2398
    %v2598 = vunpack.c.l.b16 %v2399
    %v2599 = vunpack.c.l.b16 %v2400
    %v2600 = vunpack.c.l.b16 %v2401
    %v2601 = vunpack.c.l.b16 %v2402
    %v2602 = vunpack.c.l.b16 %v2403
    %v2603 = vunpack.c.l.b16 %v2404
    %v2604 = vunpack.c.l.b16 %v2405
    %v2605 = vunpack.c.l.b16 %v2406
    %v2606 = vunpack.c.l.b16 %v2407
    %v2607 = vunpack.c.l.b16 %v2408
    %v2608 = vunpack.c.l.b16 %v2409
    %v2609 = vunpack.c.l.b16 %v2410
    %v2610 = vunpack.c.l.b16 %v2411
    %v2611 = vunpack.c.l.b16 %v2412
    %v2612 = vunpack.c.l.b16 %v2413
    %v2613 = vunpack.c.l.b16 %v2414
    %v2614 = vunpack.c.l.b16 %v2415
    %v2615 = vunpack.c.l.b16 %v2416
    %v2616 = vunpack.c.l.b16 %v2417
    %v2617 = vunpack.c.l.b16 %v2418
    %v2618 = vunpack.c.l.b16 %v2419
    %v2619 = vunpack.c.l.b16 %v2420
    %v2620 = vunpack.c.l.b16 %v2421
    %v2621 = vunpack.c.l.b16 %v2422
    %v2622 = vunpack.c.l.b16 %v2423
    %v2623 = vunpack.c.l.b16 %v2424
    %v2624 = vunpack.c.l.b16 %v2425
    %v2625 = vunpack.c.l.b16 %v2426
    %v2626 = vpack.c.b16 %v2531, %v2530
    %v2627 = vpack.c.b16 %v2533, %v2532
    %v2628 = vpack.c.b16 %v2535, %v2534
    %v2629 = vpack.c.b16 %v2537, %v2536
    %v2630 = vpack.c.b16 %v2539, %v2538
    %v2631 = vpack.c.b16 %v2541, %v2540
    %v2632 = vpack.c.b16 %v2543, %v2542
    %v2633 = vpack.c.b16 %v2545, %v2544
    %v2634 = vpack.c.b16 %v2547, %v2546
    %v2635 = vpack.c.b16 %v2549, %v2548
    %v2636 = vpack.c.b16 %v2551, %v2550
    %v2637 = vpack.c.b16 %v2553, %v2552
    %v2638 = vpack.c.b16 %v2555, %v2554
    %v2639 = vpack.c.b16 %v2557, %v2556
    %v2640 = vpack.c.b16 %v2559, %v2558
    %v2641 = vpack.c.b16 %v2561, %v2560
    %v2642 = vpack.c.b16 %v2563, %v2562
    %v2643 = vpack.c.b16 %v2565, %v2564
    %v2644 = vpack.c.b16 %v2567, %v2566
    %v2645 = vpack.c.b16 %v2569, %v2568
    %v2646 = vpack.c.b16 %v2571, %v2570
    %v2647 = vpack.c.b16 %v2573, %v2572
    %v2648 = vpack.c.b16 %v2575, %v2574
    %v2649 = vpack.c.b16 %v2577, %v2576
    %v2650 = vpack.c.b16 %v2579, %v2578
    %v2651 = vpack.c.b16 %v2581, %v2580
    %v2652 = vpack.c.b16 %v2583, %v2582
    %v2653 = vpack.c.b16 %v2585, %v2584
    %v2654 = vpack.c.b16 %v2587, %v2586
    %v2655 = vpack.c.b16 %v2589, %v2588
    %v2656 = vpack.c.b16 %v2591, %v2590
    %v2657 = vpack.c.b16 %v2593, %v2592
    %v2658 = vpack.c.b16 %v2595, %v2594
    %v2659 = vpack.c.b16 %v2597, %v2596
    %v2660 = vpack.c.b16 %v2599, %v2598
    %v2661 = vpack.c.b16 %v2601, %v2600
    %v2662 = vpack.c.b16 %v2603, %v2602
    %v2663 = vpack.c.b16 %v2605, %v2604
    %v2664 = vpack.c.b16 %v2607, %v2606
    %v2665 = vpack.c.b16 %v2609, %v2608
    %v2666 = vpack.c.b16 %v2611, %v2610
    %v2667 = vpack.c.b16 %v2613, %v2612
    %v2668 = vpack.c.b16 %v2615, %v2614
    %v2669 = vpack.c.b16 %v2617, %v2616
    %v2670 = vpack.c.b16 %v2619, %v2618
    %v2671 = vpack.c.b16 %v2621, %v2620
    %v2672 = vpack.c.b16 %v2623, %v2622
    %v2673 = vpack.c.b16 %v2625, %v2624
    %2722 = vmatprep.subr.bf16.mxu0 0
    %2723 = vmatpush1.bf16.msra.mxu0 %v2626
    %2724 = vmatprep.subr.bf16.mxu0 0
    %2725 = vmatpush1.bf16.msra.mxu0 %v2627
    %2726 = vmatprep.subr.bf16.mxu0 0
    %2727 = vmatpush1.bf16.msra.mxu0 %v2628
    %2728 = vmatprep.subr.bf16.mxu0 0
    %2729 = vmatpush1.bf16.msra.mxu0 %v2629
    %2730 = vmatprep.subr.bf16.mxu0 0
    %2731 = vmatpush1.bf16.msra.mxu0 %v2630
    %2732 = vmatprep.subr.bf16.mxu0 0
    %2733 = vmatpush1.bf16.msra.mxu0 %v2631
    %2734 = vmatprep.subr.bf16.mxu0 0
    %2735 = vmatpush1.bf16.msra.mxu0 %v2632
    %2736 = vmatprep.subr.bf16.mxu0 0
    %2737 = vmatpush1.bf16.msra.mxu0 %v2633
    %2738 = vmatprep.subr.bf16.mxu0 0
    %2739 = vmatpush1.bf16.msra.mxu0 %v2634
    %2740 = vmatprep.subr.bf16.mxu0 0
    %2741 = vmatpush1.bf16.msra.mxu0 %v2635
    %2742 = vmatprep.subr.bf16.mxu0 0
    %2743 = vmatpush1.bf16.msra.mxu0 %v2636
    %2744 = vmatprep.subr.bf16.mxu0 0
    %2745 = vmatpush1.bf16.msra.mxu0 %v2637
    %2746 = vmatprep.subr.bf16.mxu0 0
    %2747 = vmatpush1.bf16.msra.mxu0 %v2638
    %2748 = vmatprep.subr.bf16.mxu0 0
    %2749 = vmatpush1.bf16.msra.mxu0 %v2639
    %2750 = vmatprep.subr.bf16.mxu0 0
    %2751 = vmatpush1.bf16.msra.mxu0 %v2640
    %2752 = vmatprep.subr.bf16.mxu0 0
    %2753 = vmatpush1.bf16.msra.mxu0 %v2641
    %2754 = vmatprep.mubr.bf16.mxu0 %v2326
    %2755 = vmatmul.mubr.bf16.gmra.mrb[0].mxu0 %v2325
    %v2756 = vpop.f32.mrb[0].mxu0
    %v2757 = vadd.f32 %v2432, %v2756
    %v2758 = vpop.f32.mrb[0].mxu0
    %v2759 = vpop.f32.mrb[0].mxu0
    %v2760 = vpop.f32.mrb[0].mxu0
    %2761 = vdwg.mxu0
    %2762 = vmatprep.subr.bf16.mxu0 0
    %2763 = vmatpush1.bf16.msra.mxu0 %v2642
    %2764 = vmatprep.subr.bf16.mxu0 0
    %2765 = vmatpush1.bf16.msra.mxu0 %v2643
    %2766 = vmatprep.subr.bf16.mxu0 0
    %2767 = vmatpush1.bf16.msra.mxu0 %v2644
    %2768 = vmatprep.subr.bf16.mxu0 0
    %2769 = vmatpush1.bf16.msra.mxu0 %v2645
    %2770 = vmatprep.subr.bf16.mxu0 0
    %2771 = vmatpush1.bf16.msra.mxu0 %v2646
    %2772 = vmatprep.subr.bf16.mxu0 0
    %2773 = vmatpush1.bf16.msra.mxu0 %v2647
    %2774 = vmatprep.subr.bf16.mxu0 0
    %2775 = vmatpush1.bf16.msra.mxu0 %v2648
    %2776 = vmatprep.subr.bf16.mxu0 0
    %2777 = vmatpush1.bf16.msra.mxu0 %v2649
    %2778 = vmatprep.subr.bf16.mxu0 0
    %2779 = vmatpush1.bf16.msra.mxu0 %v2650
    %2780 = vmatprep.subr.bf16.mxu0 0
    %2781 = vmatpush1.bf16.msra.mxu0 %v2651
    %2782 = vmatprep.subr.bf16.mxu0 0
    %2783 = vmatpush1.bf16.msra.mxu0 %v2652
    %2784 = vmatprep.subr.bf16.mxu0 0
    %2785 = vmatpush1.bf16.msra.mxu0 %v2653
    %2786 = vmatprep.subr.bf16.mxu0 0
    %2787 = vmatpush1.bf16.msra.mxu0 %v2654
    %2788 = vmatprep.subr.bf16.mxu0 0
    %2789 = vmatpush1.bf16.msra.mxu0 %v2655
    %2790 = vmatprep.subr.bf16.mxu0 0
    %2791 = vmatpush1.bf16.msra.mxu0 %v2656
    %2792 = vmatprep.subr.bf16.mxu0 0
    %2793 = vmatpush1.bf16.msra.mxu0 %v2657
    %2794 = vmatprep.mubr.bf16.mxu0 %v2328
    %2795 = vmatmul.mubr.bf16.gmra.mrb[0].mxu0 %v2327
    %v2796 = vpop.f32.mrb[0].mxu0
    %v2797 = vadd.f32 %v2757, %v2796
    %v2798 = vpop.f32.mrb[0].mxu0
    %v2799 = vpop.f32.mrb[0].mxu0
    %v2800 = vpop.f32.mrb[0].mxu0
    %2801 = vdwg.mxu0
    %2802 = vmatprep.subr.bf16.mxu0 0
    %2803 = vmatpush1.bf16.msra.mxu0 %v2658
    %2804 = vmatprep.subr.bf16.mxu0 0
    %2805 = vmatpush1.bf16.msra.mxu0 %v2659
    %2806 = vmatprep.subr.bf16.mxu0 0
    %2807 = vmatpush1.bf16.msra.mxu0 %v2660
    %2808 = vmatprep.subr.bf16.mxu0 0
    %2809 = vmatpush1.bf16.msra.mxu0 %v2661
    %2810 = vmatprep.subr.bf16.mxu0 0
    %2811 = vmatpush1.bf16.msra.mxu0 %v2662
    %2812 = vmatprep.subr.bf16.mxu0 0
    %2813 = vmatpush1.bf16.msra.mxu0 %v2663
    %2814 = vmatprep.subr.bf16.mxu0 0
    %2815 = vmatpush1.bf16.msra.mxu0 %v2664
    %2816 = vmatprep.subr.bf16.mxu0 0
    %2817 = vmatpush1.bf16.msra.mxu0 %v2665
    %2818 = vmatprep.subr.bf16.mxu0 0
    %2819 = vmatpush1.bf16.msra.mxu0 %v2666
    %2820 = vmatprep.subr.bf16.mxu0 0
    %2821 = vmatpush1.bf16.msra.mxu0 %v2667
    %2822 = vmatprep.subr.bf16.mxu0 0
    %2823 = vmatpush1.bf16.msra.mxu0 %v2668
    %2824 = vmatprep.subr.bf16.mxu0 0
    %2825 = vmatpush1.bf16.msra.mxu0 %v2669
    %2826 = vmatprep.subr.bf16.mxu0 0
    %2827 = vmatpush1.bf16.msra.mxu0 %v2670
    %2828 = vmatprep.subr.bf16.mxu0 0
    %2829 = vmatpush1.bf16.msra.mxu0 %v2671
    %2830 = vmatprep.subr.bf16.mxu0 0
    %2831 = vmatpush1.bf16.msra.mxu0 %v2672
    %2832 = vmatprep.subr.bf16.mxu0 0
    %2833 = vmatpush1.bf16.msra.mxu0 %v2673
    %2834 = vmatprep.mubr.bf16.mxu0 %v2330
    %2835 = vmatmul.mubr.bf16.gmra.mrb[0].mxu0 %v2329
    %v2836 = vpop.f32.mrb[0].mxu0
    %v2837 = vadd.f32 %v2797, %v2836
    %v2838 = vpop.f32.mrb[0].mxu0
    %v2839 = vpop.f32.mrb[0].mxu0
    %v2840 = vpop.f32.mrb[0].mxu0
    %2841 = vdwg.mxu0
    %v2842 = vxor.u32 %v2324, 2147483648
    %v2843 = vmul.f32 %v2842, 1.442695
    %v2844 = vpow.pop %v2843
    %v2845 = vadd.f32 %v2844, 1.0
    %v2846 = vrcp.pop %v2845
    %v2847 = vmul.f32 1.0, %v2846
    %v2848 = vmul.f32 %v2847, 0.5
    %v2849 = vxor.u32 %v2837, 2147483648
    %v2850 = vmul.f32 %v2849, 1.442695
    %v2851 = vpow.pop %v2850
    %v2852 = vadd.f32 %v2851, 1.0
    %v2853 = vrcp.pop %v2852
    %v2854 = vmul.f32 1.0, %v2853
    %v2855 = vmul.f32 %v2854, 0.5
    %v2856 = vadd.f32 %v2848, %v2855
    %2857 = vst [vmem:[#allocation14] sm:$0xff] %v2856
    // Predicated region
    $region58: #{hmcn_forward.1} parent=1 // pred_check
      _
    $region59: #{hmcn_forward.1} parent=1 // pred_check_branch
      %2859 = sbr.rel (0) target = $region61
    $region60: #{hmcn_forward.1} parent=1 // pred_region
      %s2861 = ssub.s32 128, 128
      %2862 = vsyncadd [#allocation4], %s2861
      %s2864 = sshll.u32 [#allocation14], 4
      %s2865 = int_to_ptr.vmem [resolvable:$true] %s2864
      %2867 = dma.vmem_to_hbm [thread:$0]  %s2865, 128, %s7, [#allocation4]
    $region61: #{hmcn_forward.1} parent=1 // pred_fallthru
      _
    // Predicated region
    $region62: #{hmcn_forward.1} parent=1 // pred_check
      _
    $region63: #{hmcn_forward.1} parent=1 // pred_check_branch
      %2869 = sbr.rel (0) target = $region65
    $region64: #{hmcn_forward.1} parent=1 // pred_region
      %2870 = dma.done [#allocation4], 128
    $region65: #{hmcn_forward.1} parent=1 // pred_fallthru
      _
    %2871 = vsyncpa [#allocation3], 1
    %2872 = vsyncpa [#allocation6], 1
    %2873 = vsyncpa [#allocation9], 1
    %2874 = vsyncpa [#allocation12], 1
    %2875 = vsyncpa [#allocation4], 1

</llo_original>
